<compile_context>
chip_gen: v5e
topology: v5e:2x2
jax: 0.10.0
libtpu: 0.0.40
codegen_flags: <defaults>
</compile_context>

<pallas_src>
import math

import jax
import jax.numpy as jnp
from jax.experimental import pallas as pl
from jax.experimental.pallas import tpu as pltpu


# ----------------------------------------------------------------------------
# Fused kernel: all LSTM layers + fc_forecast + sigmoid, no grid, no scratch.
# ----------------------------------------------------------------------------
def make_fused_kernel(num_layers, Bp, T, H, in_dims):
    G = 4 * H
    H3 = 3 * H

    def kernel(x_ref, wi_ref, wh_ref, b_ref, fcw_ref, fcb_ref, out_ref):
        # x_ref   : (T*Bp, Din_pad) f32, time-major, batch zero-padded to Bp (mult of 8)
        # wi_ref  : (L, Din_pad, 4H) f32, gate columns [i|f|o|g], layer-0 rows zero-padded
        # wh_ref  : (L, H, 4H)       f32, gate columns [i|f|o|g]
        # b_ref   : (L, 1, 4H)       f32, b_ih + b_hh, same gate order
        # fcw_ref : (1, H) f32 ; fcb_ref : (1, 1) f32
        # out_ref : (Bp, 1) f32
        xin = x_ref[...]                                        # (T*Bp, Din_pad) f32
        h = jnp.zeros((Bp, H), jnp.float32)

        for layer in range(num_layers):                         # static unroll over layers
            d_in = in_dims[layer]
            wi = wi_ref[layer, :d_in, :].astype(jnp.bfloat16)   # (d_in, 4H), cast once/layer
            wh = wh_ref[layer].astype(jnp.bfloat16)             # (H, 4H),   cast once/layer
            b = b_ref[layer]                                    # (1, 4H) f32

            # Hoisted, lane-full input projection for all T timesteps (kept in vregs).
            proj = jnp.dot(xin.astype(jnp.bfloat16), wi,
                           preferred_element_type=jnp.float32) + b      # (T*Bp, 4H) f32

            h = jnp.zeros((Bp, H), jnp.float32)
            c = jnp.zeros((Bp, H), jnp.float32)
            last_layer = layer == num_layers - 1
            hs = []
            for t in range(T):                                  # fully unrolled recurrence
                row = t * Bp                                    # multiple of 8 -> aligned
                gates = proj[row:row + Bp] + jnp.dot(
                    h.astype(jnp.bfloat16), wh,
                    preferred_element_type=jnp.float32)         # (Bp, 4H) f32
                sig = jax.nn.sigmoid(gates[:, :H3])             # [i|f|o] in one EUP pass
                g_g = jnp.tanh(gates[:, H3:])                   # cell candidate, one tanh
                i_g = sig[:, :H]
                f_g = sig[:, H:2 * H]
                o_g = sig[:, 2 * H:H3]
                c = f_g * c + i_g * g_g
                h = o_g * jnp.tanh(c)
                if not last_layer:
                    hs.append(h)
            if not last_layer:
                # Next layer's input sequence: aligned 8-row blocks, stays in vregs.
                xin = jnp.concatenate(hs, axis=0)               # (T*Bp, H) f32

        # fc_forecast + sigmoid head: VPU multiply + lane reduction (no N=1 matmul).
        z = jnp.sum(h * fcw_ref[...], axis=-1, keepdims=True) + fcb_ref[...]
        out_ref[...] = jax.nn.sigmoid(z).astype(out_ref.dtype)

    return kernel


def _fused_call(x_tm, wi_all, wh_all, b_all, fc_w, fc_b,
                num_layers, Bp, T, H, in_dims):
    kernel = make_fused_kernel(num_layers, Bp, T, H, in_dims)
    vmem = lambda: pl.BlockSpec(memory_space=pltpu.MemorySpace.VMEM)
    return pl.pallas_call(
        kernel,
        out_shape=jax.ShapeDtypeStruct((Bp, 1), jnp.float32),
        in_specs=[vmem() for _ in range(6)],
        out_specs=vmem(),
    )(x_tm, wi_all, wh_all, b_all, fc_w, fc_b)


# ----------------------------------------------------------------------------
# Parameter construction (mimics PyTorch uniform(-1/sqrt(H), 1/sqrt(H)) init),
# packed as stacked, gate-reordered [i|f|o|g] arrays the kernel expects.
# ----------------------------------------------------------------------------
def _reorder_ifog(w, H):
    # PyTorch row/element order [i; f; g; o] -> packed order [i; f; o; g].
    return jnp.concatenate([w[:2 * H], w[3 * H:4 * H], w[2 * H:3 * H]], axis=0)


def init_params(key, input_dim, hidden_dim, num_layers):
    k = 1.0 / math.sqrt(hidden_dim)
    H, G = hidden_dim, 4 * hidden_dim
    din_pad = max(input_dim, hidden_dim)
    wi_list, wh_list, b_list = [], [], []
    for layer in range(num_layers):
        d_in = input_dim if layer == 0 else hidden_dim
        key, k1, k2, k3, k4 = jax.random.split(key, 5)
        w_ih = jax.random.uniform(k1, (G, d_in), jnp.float32, -k, k)
        w_hh = jax.random.uniform(k2, (G, H), jnp.float32, -k, k)
        b_ih = jax.random.uniform(k3, (G,), jnp.float32, -k, k)
        b_hh = jax.random.uniform(k4, (G,), jnp.float32, -k, k)
        wi = _reorder_ifog(w_ih, H).T                        # (d_in, 4H), cols [i|f|o|g]
        wh = _reorder_ifog(w_hh, H).T                        # (H, 4H)
        b = _reorder_ifog(b_ih + b_hh, H).reshape(1, G)      # (1, 4H)
        wi = jnp.pad(wi, ((0, din_pad - d_in), (0, 0)))      # zero-pad contracted rows
        wi_list.append(wi)
        wh_list.append(wh)
        b_list.append(b)
    key, k5, k6 = jax.random.split(key, 3)
    fc_w = jax.random.uniform(k5, (1, H), jnp.float32, -k, k)
    fc_b = jax.random.uniform(k6, (1,), jnp.float32, -k, k).reshape(1, 1)
    return {
        "wi": jnp.stack(wi_list),      # (L, Din_pad, 4H) f32
        "wh": jnp.stack(wh_list),      # (L, H, 4H)       f32
        "b": jnp.stack(b_list),        # (L, 1, 4H)       f32
        "fc_w": fc_w,                  # (1, H)
        "fc_b": fc_b,                  # (1, 1)
    }


@jax.jit
def ililstm_forward(x, params):
    """x: batch-first (B, T, input_dim) f32 -> (B, 1) f32 (sigmoid output)."""
    B, T, D = x.shape
    wi_all, wh_all, b_all = params["wi"], params["wh"], params["b"]
    fc_w, fc_b = params["fc_w"], params["fc_b"]
    L, din_pad, G = wi_all.shape
    H = G // 4
    Bp = ((B + 7) // 8) * 8                       # pad batch to a sublane multiple

    # One tiny formatting op: time-major flatten, batch padded to Bp, features padded
    # to Din_pad (layer-0 weight rows beyond D are zero, so this is exact).
    x_tm = jnp.transpose(x.astype(jnp.float32), (1, 0, 2))          # (T, B, D)
    x_tm = jnp.pad(x_tm, ((0, 0), (0, Bp - B), (0, din_pad - D)))   # (T, Bp, Din_pad)
    x_tm = x_tm.reshape(T * Bp, din_pad)

    in_dims = (din_pad,) + (H,) * (L - 1)
    out = _fused_call(x_tm, wi_all, wh_all, b_all, fc_w, fc_b,
                      L, Bp, T, H, in_dims)
    return out[:B]


# ----------------------------------------------------------------------------
# Pure-JAX f32 reference for correctness checking (same packed params).
# ----------------------------------------------------------------------------
def ililstm_reference(x, params):
    B, T, D = x.shape
    wi_all, wh_all, b_all = params["wi"], params["wh"], params["b"]
    L, din_pad, G = wi_all.shape
    H = G // 4
    seq = jnp.transpose(x.astype(jnp.float32), (1, 0, 2))           # (T, B, D)
    seq = jnp.pad(seq, ((0, 0), (0, 0), (0, din_pad - D)))
    for layer in range(L):
        d_in = din_pad if layer == 0 else H
        wi, wh, b = wi_all[layer, :d_in], wh_all[layer], b_all[layer]
        h = jnp.zeros((B, H), jnp.float32)
        c = jnp.zeros((B, H), jnp.float32)
        outs = []
        for t in range(T):
            g = seq[t] @ wi + h @ wh + b
            i_g = jax.nn.sigmoid(g[:, 0:H])
            f_g = jax.nn.sigmoid(g[:, H:2 * H])
            o_g = jax.nn.sigmoid(g[:, 2 * H:3 * H])
            g_g = jnp.tanh(g[:, 3 * H:])
            c = f_g * c + i_g * g_g
            h = o_g * jnp.tanh(c)
            outs.append(h)
        seq = jnp.stack(outs, axis=0)
    return jax.nn.sigmoid(seq[-1] @ params["fc_w"].T + params["fc_b"])


if __name__ == "__main__":
    # Small shapes consistent with the module's forward: x is (batch, seq, input_dim).
    batch, seq_len, input_dim, hidden_dim, num_layers = 2, 8, 4, 32, 2

    key = jax.random.PRNGKey(0)
    key, xkey, pkey = jax.random.split(key, 3)
    x = jax.random.normal(xkey, (batch, seq_len, input_dim), jnp.float32)
    params = init_params(pkey, input_dim, hidden_dim, num_layers)

    out = ililstm_forward(x, params)
    out = jax.block_until_ready(out)

    ref = ililstm_reference(x, params)
    assert out.shape == (batch, 1), out.shape
    # Kernel uses bf16 MXU operands with f32 accumulation -> loosened tolerance
    # vs. the pure-f32 reference (per perf review).
    assert jnp.allclose(out, ref, atol=2e-2, rtol=0.0), (out, ref)

    print("KERNEL_OK")
</pallas_src>

<mosaic_0001>
module attributes {stable_mosaic.version = 11 : i64} {
  func.func @kernel(%arg0: memref<64x32xf32, #tpu.memory_space<vmem>>, %arg1: memref<2x32x128xf32, #tpu.memory_space<vmem>>, %arg2: memref<2x32x128xf32, #tpu.memory_space<vmem>>, %arg3: memref<2x1x128xf32, #tpu.memory_space<vmem>>, %arg4: memref<1x32xf32, #tpu.memory_space<vmem>>, %arg5: memref<1x1xf32, #tpu.memory_space<vmem>>, %arg6: memref<8x1xf32, #tpu.memory_space<vmem>>) attributes {dimension_semantics = [], scalar_prefetch = 0 : i64, scratch_operands = 0 : i64, tpu.core_type = #tpu.core_type<tc>} {
    %c0 = arith.constant 0 : index
    %c0_0 = arith.constant 0 : index
    %0 = vector.load %arg0[%c0, %c0_0] : memref<64x32xf32, #tpu.memory_space<vmem>>, vector<64x32xf32>
    %c0_1 = arith.constant 0 : index
    %c0_2 = arith.constant 0 : index
    %c0_3 = arith.constant 0 : index
    %1 = vector.load %arg1[%c0_1, %c0_2, %c0_3] : memref<2x32x128xf32, #tpu.memory_space<vmem>>, vector<1x32x128xf32>
    %2 = vector.shape_cast %1 : vector<1x32x128xf32> to vector<32x128xf32>
    %3 = arith.truncf %2 : vector<32x128xf32> to vector<32x128xbf16>
    %c0_4 = arith.constant 0 : index
    %c0_5 = arith.constant 0 : index
    %c0_6 = arith.constant 0 : index
    %4 = vector.load %arg2[%c0_4, %c0_5, %c0_6] : memref<2x32x128xf32, #tpu.memory_space<vmem>>, vector<1x32x128xf32>
    %5 = vector.shape_cast %4 : vector<1x32x128xf32> to vector<32x128xf32>
    %6 = arith.truncf %5 : vector<32x128xf32> to vector<32x128xbf16>
    %c0_7 = arith.constant 0 : index
    %c0_8 = arith.constant 0 : index
    %c0_9 = arith.constant 0 : index
    %7 = vector.load %arg3[%c0_7, %c0_8, %c0_9] : memref<2x1x128xf32, #tpu.memory_space<vmem>>, vector<1x1x128xf32>
    %8 = vector.shape_cast %7 : vector<1x1x128xf32> to vector<1x128xf32>
    %9 = arith.truncf %0 : vector<64x32xf32> to vector<64x32xbf16>
    %cst = arith.constant dense<0.000000e+00> : vector<64x128xf32>
    %10 = tpu.matmul %9, %3, %cst {dimension_numbers = #tpu.dot_dimension_numbers<[1], [0], [0], [1], [0, 0, 1, 1], [], []>} : vector<64x32xbf16>, vector<32x128xbf16>, vector<64x128xf32> -> vector<64x128xf32>
    %11 = vector.broadcast %8 : vector<1x128xf32> to vector<64x128xf32>
    %12 = arith.addf %10, %11 : vector<64x128xf32>
    %cst_10 = arith.constant 0.000000e+00 : f32
    %13 = vector.broadcast %cst_10 : f32 to vector<8x32xf32>
    %cst_11 = arith.constant 0.000000e+00 : f32
    %14 = vector.broadcast %cst_11 : f32 to vector<8x32xf32>
    %15 = vector.extract_strided_slice %12 {offsets = [0, 0], sizes = [8, 128], strides = [1, 1]} : vector<64x128xf32> to vector<8x128xf32>
    %16 = arith.truncf %13 : vector<8x32xf32> to vector<8x32xbf16>
    %cst_12 = arith.constant dense<0.000000e+00> : vector<8x128xf32>
    %17 = tpu.matmul %16, %6, %cst_12 {dimension_numbers = #tpu.dot_dimension_numbers<[1], [0], [0], [1], [0, 0, 1, 1], [], []>} : vector<8x32xbf16>, vector<32x128xbf16>, vector<8x128xf32> -> vector<8x128xf32>
    %18 = arith.addf %15, %17 : vector<8x128xf32>
    %19 = vector.extract_strided_slice %18 {offsets = [0, 0], sizes = [8, 96], strides = [1, 1]} : vector<8x128xf32> to vector<8x96xf32>
    %20 = arith.negf %19 : vector<8x96xf32>
    %21 = math.exp %20 : vector<8x96xf32>
    %cst_13 = arith.constant 1.000000e+00 : f32
    %22 = vector.broadcast %cst_13 : f32 to vector<8x96xf32>
    %23 = arith.addf %22, %21 : vector<8x96xf32>
    %24 = arith.divf %22, %23 : vector<8x96xf32>
    %25 = vector.extract_strided_slice %18 {offsets = [0, 96], sizes = [8, 32], strides = [1, 1]} : vector<8x128xf32> to vector<8x32xf32>
    %26 = math.tanh %25 : vector<8x32xf32>
    %27 = vector.extract_strided_slice %24 {offsets = [0, 0], sizes = [8, 32], strides = [1, 1]} : vector<8x96xf32> to vector<8x32xf32>
    %28 = vector.extract_strided_slice %24 {offsets = [0, 32], sizes = [8, 32], strides = [1, 1]} : vector<8x96xf32> to vector<8x32xf32>
    %29 = vector.extract_strided_slice %24 {offsets = [0, 64], sizes = [8, 32], strides = [1, 1]} : vector<8x96xf32> to vector<8x32xf32>
    %30 = arith.mulf %28, %14 : vector<8x32xf32>
    %31 = arith.mulf %27, %26 : vector<8x32xf32>
    %32 = arith.addf %30, %31 : vector<8x32xf32>
    %33 = math.tanh %32 : vector<8x32xf32>
    %34 = arith.mulf %29, %33 : vector<8x32xf32>
    %35 = vector.extract_strided_slice %12 {offsets = [8, 0], sizes = [8, 128], strides = [1, 1]} : vector<64x128xf32> to vector<8x128xf32>
    %36 = arith.truncf %34 : vector<8x32xf32> to vector<8x32xbf16>
    %cst_14 = arith.constant dense<0.000000e+00> : vector<8x128xf32>
    %37 = tpu.matmul %36, %6, %cst_14 {dimension_numbers = #tpu.dot_dimension_numbers<[1], [0], [0], [1], [0, 0, 1, 1], [], []>} : vector<8x32xbf16>, vector<32x128xbf16>, vector<8x128xf32> -> vector<8x128xf32>
    %38 = arith.addf %35, %37 : vector<8x128xf32>
    %39 = vector.extract_strided_slice %38 {offsets = [0, 0], sizes = [8, 96], strides = [1, 1]} : vector<8x128xf32> to vector<8x96xf32>
    %40 = arith.negf %39 : vector<8x96xf32>
    %41 = math.exp %40 : vector<8x96xf32>
    %cst_15 = arith.constant 1.000000e+00 : f32
    %42 = vector.broadcast %cst_15 : f32 to vector<8x96xf32>
    %43 = arith.addf %42, %41 : vector<8x96xf32>
    %44 = arith.divf %42, %43 : vector<8x96xf32>
    %45 = vector.extract_strided_slice %38 {offsets = [0, 96], sizes = [8, 32], strides = [1, 1]} : vector<8x128xf32> to vector<8x32xf32>
    %46 = math.tanh %45 : vector<8x32xf32>
    %47 = vector.extract_strided_slice %44 {offsets = [0, 0], sizes = [8, 32], strides = [1, 1]} : vector<8x96xf32> to vector<8x32xf32>
    %48 = vector.extract_strided_slice %44 {offsets = [0, 32], sizes = [8, 32], strides = [1, 1]} : vector<8x96xf32> to vector<8x32xf32>
    %49 = vector.extract_strided_slice %44 {offsets = [0, 64], sizes = [8, 32], strides = [1, 1]} : vector<8x96xf32> to vector<8x32xf32>
    %50 = arith.mulf %48, %32 : vector<8x32xf32>
    %51 = arith.mulf %47, %46 : vector<8x32xf32>
    %52 = arith.addf %50, %51 : vector<8x32xf32>
    %53 = math.tanh %52 : vector<8x32xf32>
    %54 = arith.mulf %49, %53 : vector<8x32xf32>
    %55 = vector.extract_strided_slice %12 {offsets = [16, 0], sizes = [8, 128], strides = [1, 1]} : vector<64x128xf32> to vector<8x128xf32>
    %56 = arith.truncf %54 : vector<8x32xf32> to vector<8x32xbf16>
    %cst_16 = arith.constant dense<0.000000e+00> : vector<8x128xf32>
    %57 = tpu.matmul %56, %6, %cst_16 {dimension_numbers = #tpu.dot_dimension_numbers<[1], [0], [0], [1], [0, 0, 1, 1], [], []>} : vector<8x32xbf16>, vector<32x128xbf16>, vector<8x128xf32> -> vector<8x128xf32>
    %58 = arith.addf %55, %57 : vector<8x128xf32>
    %59 = vector.extract_strided_slice %58 {offsets = [0, 0], sizes = [8, 96], strides = [1, 1]} : vector<8x128xf32> to vector<8x96xf32>
    %60 = arith.negf %59 : vector<8x96xf32>
    %61 = math.exp %60 : vector<8x96xf32>
    %cst_17 = arith.constant 1.000000e+00 : f32
    %62 = vector.broadcast %cst_17 : f32 to vector<8x96xf32>
    %63 = arith.addf %62, %61 : vector<8x96xf32>
    %64 = arith.divf %62, %63 : vector<8x96xf32>
    %65 = vector.extract_strided_slice %58 {offsets = [0, 96], sizes = [8, 32], strides = [1, 1]} : vector<8x128xf32> to vector<8x32xf32>
    %66 = math.tanh %65 : vector<8x32xf32>
    %67 = vector.extract_strided_slice %64 {offsets = [0, 0], sizes = [8, 32], strides = [1, 1]} : vector<8x96xf32> to vector<8x32xf32>
    %68 = vector.extract_strided_slice %64 {offsets = [0, 32], sizes = [8, 32], strides = [1, 1]} : vector<8x96xf32> to vector<8x32xf32>
    %69 = vector.extract_strided_slice %64 {offsets = [0, 64], sizes = [8, 32], strides = [1, 1]} : vector<8x96xf32> to vector<8x32xf32>
    %70 = arith.mulf %68, %52 : vector<8x32xf32>
    %71 = arith.mulf %67, %66 : vector<8x32xf32>
    %72 = arith.addf %70, %71 : vector<8x32xf32>
    %73 = math.tanh %72 : vector<8x32xf32>
    %74 = arith.mulf %69, %73 : vector<8x32xf32>
    %75 = vector.extract_strided_slice %12 {offsets = [24, 0], sizes = [8, 128], strides = [1, 1]} : vector<64x128xf32> to vector<8x128xf32>
    %76 = arith.truncf %74 : vector<8x32xf32> to vector<8x32xbf16>
    %cst_18 = arith.constant dense<0.000000e+00> : vector<8x128xf32>
    %77 = tpu.matmul %76, %6, %cst_18 {dimension_numbers = #tpu.dot_dimension_numbers<[1], [0], [0], [1], [0, 0, 1, 1], [], []>} : vector<8x32xbf16>, vector<32x128xbf16>, vector<8x128xf32> -> vector<8x128xf32>
    %78 = arith.addf %75, %77 : vector<8x128xf32>
    %79 = vector.extract_strided_slice %78 {offsets = [0, 0], sizes = [8, 96], strides = [1, 1]} : vector<8x128xf32> to vector<8x96xf32>
    %80 = arith.negf %79 : vector<8x96xf32>
    %81 = math.exp %80 : vector<8x96xf32>
    %cst_19 = arith.constant 1.000000e+00 : f32
    %82 = vector.broadcast %cst_19 : f32 to vector<8x96xf32>
    %83 = arith.addf %82, %81 : vector<8x96xf32>
    %84 = arith.divf %82, %83 : vector<8x96xf32>
    %85 = vector.extract_strided_slice %78 {offsets = [0, 96], sizes = [8, 32], strides = [1, 1]} : vector<8x128xf32> to vector<8x32xf32>
    %86 = math.tanh %85 : vector<8x32xf32>
    %87 = vector.extract_strided_slice %84 {offsets = [0, 0], sizes = [8, 32], strides = [1, 1]} : vector<8x96xf32> to vector<8x32xf32>
    %88 = vector.extract_strided_slice %84 {offsets = [0, 32], sizes = [8, 32], strides = [1, 1]} : vector<8x96xf32> to vector<8x32xf32>
    %89 = vector.extract_strided_slice %84 {offsets = [0, 64], sizes = [8, 32], strides = [1, 1]} : vector<8x96xf32> to vector<8x32xf32>
    %90 = arith.mulf %88, %72 : vector<8x32xf32>
    %91 = arith.mulf %87, %86 : vector<8x32xf32>
    %92 = arith.addf %90, %91 : vector<8x32xf32>
    %93 = math.tanh %92 : vector<8x32xf32>
    %94 = arith.mulf %89, %93 : vector<8x32xf32>
    %95 = vector.extract_strided_slice %12 {offsets = [32, 0], sizes = [8, 128], strides = [1, 1]} : vector<64x128xf32> to vector<8x128xf32>
    %96 = arith.truncf %94 : vector<8x32xf32> to vector<8x32xbf16>
    %cst_20 = arith.constant dense<0.000000e+00> : vector<8x128xf32>
    %97 = tpu.matmul %96, %6, %cst_20 {dimension_numbers = #tpu.dot_dimension_numbers<[1], [0], [0], [1], [0, 0, 1, 1], [], []>} : vector<8x32xbf16>, vector<32x128xbf16>, vector<8x128xf32> -> vector<8x128xf32>
    %98 = arith.addf %95, %97 : vector<8x128xf32>
    %99 = vector.extract_strided_slice %98 {offsets = [0, 0], sizes = [8, 96], strides = [1, 1]} : vector<8x128xf32> to vector<8x96xf32>
    %100 = arith.negf %99 : vector<8x96xf32>
    %101 = math.exp %100 : vector<8x96xf32>
    %cst_21 = arith.constant 1.000000e+00 : f32
    %102 = vector.broadcast %cst_21 : f32 to vector<8x96xf32>
    %103 = arith.addf %102, %101 : vector<8x96xf32>
    %104 = arith.divf %102, %103 : vector<8x96xf32>
    %105 = vector.extract_strided_slice %98 {offsets = [0, 96], sizes = [8, 32], strides = [1, 1]} : vector<8x128xf32> to vector<8x32xf32>
    %106 = math.tanh %105 : vector<8x32xf32>
    %107 = vector.extract_strided_slice %104 {offsets = [0, 0], sizes = [8, 32], strides = [1, 1]} : vector<8x96xf32> to vector<8x32xf32>
    %108 = vector.extract_strided_slice %104 {offsets = [0, 32], sizes = [8, 32], strides = [1, 1]} : vector<8x96xf32> to vector<8x32xf32>
    %109 = vector.extract_strided_slice %104 {offsets = [0, 64], sizes = [8, 32], strides = [1, 1]} : vector<8x96xf32> to vector<8x32xf32>
    %110 = arith.mulf %108, %92 : vector<8x32xf32>
    %111 = arith.mulf %107, %106 : vector<8x32xf32>
    %112 = arith.addf %110, %111 : vector<8x32xf32>
    %113 = math.tanh %112 : vector<8x32xf32>
    %114 = arith.mulf %109, %113 : vector<8x32xf32>
    %115 = vector.extract_strided_slice %12 {offsets = [40, 0], sizes = [8, 128], strides = [1, 1]} : vector<64x128xf32> to vector<8x128xf32>
    %116 = arith.truncf %114 : vector<8x32xf32> to vector<8x32xbf16>
    %cst_22 = arith.constant dense<0.000000e+00> : vector<8x128xf32>
    %117 = tpu.matmul %116, %6, %cst_22 {dimension_numbers = #tpu.dot_dimension_numbers<[1], [0], [0], [1], [0, 0, 1, 1], [], []>} : vector<8x32xbf16>, vector<32x128xbf16>, vector<8x128xf32> -> vector<8x128xf32>
    %118 = arith.addf %115, %117 : vector<8x128xf32>
    %119 = vector.extract_strided_slice %118 {offsets = [0, 0], sizes = [8, 96], strides = [1, 1]} : vector<8x128xf32> to vector<8x96xf32>
    %120 = arith.negf %119 : vector<8x96xf32>
    %121 = math.exp %120 : vector<8x96xf32>
    %cst_23 = arith.constant 1.000000e+00 : f32
    %122 = vector.broadcast %cst_23 : f32 to vector<8x96xf32>
    %123 = arith.addf %122, %121 : vector<8x96xf32>
    %124 = arith.divf %122, %123 : vector<8x96xf32>
    %125 = vector.extract_strided_slice %118 {offsets = [0, 96], sizes = [8, 32], strides = [1, 1]} : vector<8x128xf32> to vector<8x32xf32>
    %126 = math.tanh %125 : vector<8x32xf32>
    %127 = vector.extract_strided_slice %124 {offsets = [0, 0], sizes = [8, 32], strides = [1, 1]} : vector<8x96xf32> to vector<8x32xf32>
    %128 = vector.extract_strided_slice %124 {offsets = [0, 32], sizes = [8, 32], strides = [1, 1]} : vector<8x96xf32> to vector<8x32xf32>
    %129 = vector.extract_strided_slice %124 {offsets = [0, 64], sizes = [8, 32], strides = [1, 1]} : vector<8x96xf32> to vector<8x32xf32>
    %130 = arith.mulf %128, %112 : vector<8x32xf32>
    %131 = arith.mulf %127, %126 : vector<8x32xf32>
    %132 = arith.addf %130, %131 : vector<8x32xf32>
    %133 = math.tanh %132 : vector<8x32xf32>
    %134 = arith.mulf %129, %133 : vector<8x32xf32>
    %135 = vector.extract_strided_slice %12 {offsets = [48, 0], sizes = [8, 128], strides = [1, 1]} : vector<64x128xf32> to vector<8x128xf32>
    %136 = arith.truncf %134 : vector<8x32xf32> to vector<8x32xbf16>
    %cst_24 = arith.constant dense<0.000000e+00> : vector<8x128xf32>
    %137 = tpu.matmul %136, %6, %cst_24 {dimension_numbers = #tpu.dot_dimension_numbers<[1], [0], [0], [1], [0, 0, 1, 1], [], []>} : vector<8x32xbf16>, vector<32x128xbf16>, vector<8x128xf32> -> vector<8x128xf32>
    %138 = arith.addf %135, %137 : vector<8x128xf32>
    %139 = vector.extract_strided_slice %138 {offsets = [0, 0], sizes = [8, 96], strides = [1, 1]} : vector<8x128xf32> to vector<8x96xf32>
    %140 = arith.negf %139 : vector<8x96xf32>
    %141 = math.exp %140 : vector<8x96xf32>
    %cst_25 = arith.constant 1.000000e+00 : f32
    %142 = vector.broadcast %cst_25 : f32 to vector<8x96xf32>
    %143 = arith.addf %142, %141 : vector<8x96xf32>
    %144 = arith.divf %142, %143 : vector<8x96xf32>
    %145 = vector.extract_strided_slice %138 {offsets = [0, 96], sizes = [8, 32], strides = [1, 1]} : vector<8x128xf32> to vector<8x32xf32>
    %146 = math.tanh %145 : vector<8x32xf32>
    %147 = vector.extract_strided_slice %144 {offsets = [0, 0], sizes = [8, 32], strides = [1, 1]} : vector<8x96xf32> to vector<8x32xf32>
    %148 = vector.extract_strided_slice %144 {offsets = [0, 32], sizes = [8, 32], strides = [1, 1]} : vector<8x96xf32> to vector<8x32xf32>
    %149 = vector.extract_strided_slice %144 {offsets = [0, 64], sizes = [8, 32], strides = [1, 1]} : vector<8x96xf32> to vector<8x32xf32>
    %150 = arith.mulf %148, %132 : vector<8x32xf32>
    %151 = arith.mulf %147, %146 : vector<8x32xf32>
    %152 = arith.addf %150, %151 : vector<8x32xf32>
    %153 = math.tanh %152 : vector<8x32xf32>
    %154 = arith.mulf %149, %153 : vector<8x32xf32>
    %155 = vector.extract_strided_slice %12 {offsets = [56, 0], sizes = [8, 128], strides = [1, 1]} : vector<64x128xf32> to vector<8x128xf32>
    %156 = arith.truncf %154 : vector<8x32xf32> to vector<8x32xbf16>
    %cst_26 = arith.constant dense<0.000000e+00> : vector<8x128xf32>
    %157 = tpu.matmul %156, %6, %cst_26 {dimension_numbers = #tpu.dot_dimension_numbers<[1], [0], [0], [1], [0, 0, 1, 1], [], []>} : vector<8x32xbf16>, vector<32x128xbf16>, vector<8x128xf32> -> vector<8x128xf32>
    %158 = arith.addf %155, %157 : vector<8x128xf32>
    %159 = vector.extract_strided_slice %158 {offsets = [0, 0], sizes = [8, 96], strides = [1, 1]} : vector<8x128xf32> to vector<8x96xf32>
    %160 = arith.negf %159 : vector<8x96xf32>
    %161 = math.exp %160 : vector<8x96xf32>
    %cst_27 = arith.constant 1.000000e+00 : f32
    %162 = vector.broadcast %cst_27 : f32 to vector<8x96xf32>
    %163 = arith.addf %162, %161 : vector<8x96xf32>
    %164 = arith.divf %162, %163 : vector<8x96xf32>
    %165 = vector.extract_strided_slice %158 {offsets = [0, 96], sizes = [8, 32], strides = [1, 1]} : vector<8x128xf32> to vector<8x32xf32>
    %166 = math.tanh %165 : vector<8x32xf32>
    %167 = vector.extract_strided_slice %164 {offsets = [0, 0], sizes = [8, 32], strides = [1, 1]} : vector<8x96xf32> to vector<8x32xf32>
    %168 = vector.extract_strided_slice %164 {offsets = [0, 32], sizes = [8, 32], strides = [1, 1]} : vector<8x96xf32> to vector<8x32xf32>
    %169 = vector.extract_strided_slice %164 {offsets = [0, 64], sizes = [8, 32], strides = [1, 1]} : vector<8x96xf32> to vector<8x32xf32>
    %170 = arith.mulf %168, %152 : vector<8x32xf32>
    %171 = arith.mulf %167, %166 : vector<8x32xf32>
    %172 = arith.addf %170, %171 : vector<8x32xf32>
    %173 = math.tanh %172 : vector<8x32xf32>
    %174 = arith.mulf %169, %173 : vector<8x32xf32>
    %175 = tpu.concatenate %34, %54, %74, %94, %114, %134, %154, %174 in 0 : vector<8x32xf32>, vector<8x32xf32>, vector<8x32xf32>, vector<8x32xf32>, vector<8x32xf32>, vector<8x32xf32>, vector<8x32xf32>, vector<8x32xf32> -> vector<64x32xf32>
    %c1 = arith.constant 1 : index
    %c0_28 = arith.constant 0 : index
    %c0_29 = arith.constant 0 : index
    %176 = vector.load %arg1[%c1, %c0_28, %c0_29] : memref<2x32x128xf32, #tpu.memory_space<vmem>>, vector<1x32x128xf32>
    %177 = vector.shape_cast %176 : vector<1x32x128xf32> to vector<32x128xf32>
    %178 = arith.truncf %177 : vector<32x128xf32> to vector<32x128xbf16>
    %c1_30 = arith.constant 1 : index
    %c0_31 = arith.constant 0 : index
    %c0_32 = arith.constant 0 : index
    %179 = vector.load %arg2[%c1_30, %c0_31, %c0_32] : memref<2x32x128xf32, #tpu.memory_space<vmem>>, vector<1x32x128xf32>
    %180 = vector.shape_cast %179 : vector<1x32x128xf32> to vector<32x128xf32>
    %181 = arith.truncf %180 : vector<32x128xf32> to vector<32x128xbf16>
    %c1_33 = arith.constant 1 : index
    %c0_34 = arith.constant 0 : index
    %c0_35 = arith.constant 0 : index
    %182 = vector.load %arg3[%c1_33, %c0_34, %c0_35] : memref<2x1x128xf32, #tpu.memory_space<vmem>>, vector<1x1x128xf32>
    %183 = vector.shape_cast %182 : vector<1x1x128xf32> to vector<1x128xf32>
    %184 = arith.truncf %175 : vector<64x32xf32> to vector<64x32xbf16>
    %cst_36 = arith.constant dense<0.000000e+00> : vector<64x128xf32>
    %185 = tpu.matmul %184, %178, %cst_36 {dimension_numbers = #tpu.dot_dimension_numbers<[1], [0], [0], [1], [0, 0, 1, 1], [], []>} : vector<64x32xbf16>, vector<32x128xbf16>, vector<64x128xf32> -> vector<64x128xf32>
    %186 = vector.broadcast %183 : vector<1x128xf32> to vector<64x128xf32>
    %187 = arith.addf %185, %186 : vector<64x128xf32>
    %cst_37 = arith.constant 0.000000e+00 : f32
    %188 = vector.broadcast %cst_37 : f32 to vector<8x32xf32>
    %cst_38 = arith.constant 0.000000e+00 : f32
    %189 = vector.broadcast %cst_38 : f32 to vector<8x32xf32>
    %190 = vector.extract_strided_slice %187 {offsets = [0, 0], sizes = [8, 128], strides = [1, 1]} : vector<64x128xf32> to vector<8x128xf32>
    %191 = arith.truncf %188 : vector<8x32xf32> to vector<8x32xbf16>
    %cst_39 = arith.constant dense<0.000000e+00> : vector<8x128xf32>
    %192 = tpu.matmul %191, %181, %cst_39 {dimension_numbers = #tpu.dot_dimension_numbers<[1], [0], [0], [1], [0, 0, 1, 1], [], []>} : vector<8x32xbf16>, vector<32x128xbf16>, vector<8x128xf32> -> vector<8x128xf32>
    %193 = arith.addf %190, %192 : vector<8x128xf32>
    %194 = vector.extract_strided_slice %193 {offsets = [0, 0], sizes = [8, 96], strides = [1, 1]} : vector<8x128xf32> to vector<8x96xf32>
    %195 = arith.negf %194 : vector<8x96xf32>
    %196 = math.exp %195 : vector<8x96xf32>
    %cst_40 = arith.constant 1.000000e+00 : f32
    %197 = vector.broadcast %cst_40 : f32 to vector<8x96xf32>
    %198 = arith.addf %197, %196 : vector<8x96xf32>
    %199 = arith.divf %197, %198 : vector<8x96xf32>
    %200 = vector.extract_strided_slice %193 {offsets = [0, 96], sizes = [8, 32], strides = [1, 1]} : vector<8x128xf32> to vector<8x32xf32>
    %201 = math.tanh %200 : vector<8x32xf32>
    %202 = vector.extract_strided_slice %199 {offsets = [0, 0], sizes = [8, 32], strides = [1, 1]} : vector<8x96xf32> to vector<8x32xf32>
    %203 = vector.extract_strided_slice %199 {offsets = [0, 32], sizes = [8, 32], strides = [1, 1]} : vector<8x96xf32> to vector<8x32xf32>
    %204 = vector.extract_strided_slice %199 {offsets = [0, 64], sizes = [8, 32], strides = [1, 1]} : vector<8x96xf32> to vector<8x32xf32>
    %205 = arith.mulf %203, %189 : vector<8x32xf32>
    %206 = arith.mulf %202, %201 : vector<8x32xf32>
    %207 = arith.addf %205, %206 : vector<8x32xf32>
    %208 = math.tanh %207 : vector<8x32xf32>
    %209 = arith.mulf %204, %208 : vector<8x32xf32>
    %210 = vector.extract_strided_slice %187 {offsets = [8, 0], sizes = [8, 128], strides = [1, 1]} : vector<64x128xf32> to vector<8x128xf32>
    %211 = arith.truncf %209 : vector<8x32xf32> to vector<8x32xbf16>
    %cst_41 = arith.constant dense<0.000000e+00> : vector<8x128xf32>
    %212 = tpu.matmul %211, %181, %cst_41 {dimension_numbers = #tpu.dot_dimension_numbers<[1], [0], [0], [1], [0, 0, 1, 1], [], []>} : vector<8x32xbf16>, vector<32x128xbf16>, vector<8x128xf32> -> vector<8x128xf32>
    %213 = arith.addf %210, %212 : vector<8x128xf32>
    %214 = vector.extract_strided_slice %213 {offsets = [0, 0], sizes = [8, 96], strides = [1, 1]} : vector<8x128xf32> to vector<8x96xf32>
    %215 = arith.negf %214 : vector<8x96xf32>
    %216 = math.exp %215 : vector<8x96xf32>
    %cst_42 = arith.constant 1.000000e+00 : f32
    %217 = vector.broadcast %cst_42 : f32 to vector<8x96xf32>
    %218 = arith.addf %217, %216 : vector<8x96xf32>
    %219 = arith.divf %217, %218 : vector<8x96xf32>
    %220 = vector.extract_strided_slice %213 {offsets = [0, 96], sizes = [8, 32], strides = [1, 1]} : vector<8x128xf32> to vector<8x32xf32>
    %221 = math.tanh %220 : vector<8x32xf32>
    %222 = vector.extract_strided_slice %219 {offsets = [0, 0], sizes = [8, 32], strides = [1, 1]} : vector<8x96xf32> to vector<8x32xf32>
    %223 = vector.extract_strided_slice %219 {offsets = [0, 32], sizes = [8, 32], strides = [1, 1]} : vector<8x96xf32> to vector<8x32xf32>
    %224 = vector.extract_strided_slice %219 {offsets = [0, 64], sizes = [8, 32], strides = [1, 1]} : vector<8x96xf32> to vector<8x32xf32>
    %225 = arith.mulf %223, %207 : vector<8x32xf32>
    %226 = arith.mulf %222, %221 : vector<8x32xf32>
    %227 = arith.addf %225, %226 : vector<8x32xf32>
    %228 = math.tanh %227 : vector<8x32xf32>
    %229 = arith.mulf %224, %228 : vector<8x32xf32>
    %230 = vector.extract_strided_slice %187 {offsets = [16, 0], sizes = [8, 128], strides = [1, 1]} : vector<64x128xf32> to vector<8x128xf32>
    %231 = arith.truncf %229 : vector<8x32xf32> to vector<8x32xbf16>
    %cst_43 = arith.constant dense<0.000000e+00> : vector<8x128xf32>
    %232 = tpu.matmul %231, %181, %cst_43 {dimension_numbers = #tpu.dot_dimension_numbers<[1], [0], [0], [1], [0, 0, 1, 1], [], []>} : vector<8x32xbf16>, vector<32x128xbf16>, vector<8x128xf32> -> vector<8x128xf32>
    %233 = arith.addf %230, %232 : vector<8x128xf32>
    %234 = vector.extract_strided_slice %233 {offsets = [0, 0], sizes = [8, 96], strides = [1, 1]} : vector<8x128xf32> to vector<8x96xf32>
    %235 = arith.negf %234 : vector<8x96xf32>
    %236 = math.exp %235 : vector<8x96xf32>
    %cst_44 = arith.constant 1.000000e+00 : f32
    %237 = vector.broadcast %cst_44 : f32 to vector<8x96xf32>
    %238 = arith.addf %237, %236 : vector<8x96xf32>
    %239 = arith.divf %237, %238 : vector<8x96xf32>
    %240 = vector.extract_strided_slice %233 {offsets = [0, 96], sizes = [8, 32], strides = [1, 1]} : vector<8x128xf32> to vector<8x32xf32>
    %241 = math.tanh %240 : vector<8x32xf32>
    %242 = vector.extract_strided_slice %239 {offsets = [0, 0], sizes = [8, 32], strides = [1, 1]} : vector<8x96xf32> to vector<8x32xf32>
    %243 = vector.extract_strided_slice %239 {offsets = [0, 32], sizes = [8, 32], strides = [1, 1]} : vector<8x96xf32> to vector<8x32xf32>
    %244 = vector.extract_strided_slice %239 {offsets = [0, 64], sizes = [8, 32], strides = [1, 1]} : vector<8x96xf32> to vector<8x32xf32>
    %245 = arith.mulf %243, %227 : vector<8x32xf32>
    %246 = arith.mulf %242, %241 : vector<8x32xf32>
    %247 = arith.addf %245, %246 : vector<8x32xf32>
    %248 = math.tanh %247 : vector<8x32xf32>
    %249 = arith.mulf %244, %248 : vector<8x32xf32>
    %250 = vector.extract_strided_slice %187 {offsets = [24, 0], sizes = [8, 128], strides = [1, 1]} : vector<64x128xf32> to vector<8x128xf32>
    %251 = arith.truncf %249 : vector<8x32xf32> to vector<8x32xbf16>
    %cst_45 = arith.constant dense<0.000000e+00> : vector<8x128xf32>
    %252 = tpu.matmul %251, %181, %cst_45 {dimension_numbers = #tpu.dot_dimension_numbers<[1], [0], [0], [1], [0, 0, 1, 1], [], []>} : vector<8x32xbf16>, vector<32x128xbf16>, vector<8x128xf32> -> vector<8x128xf32>
    %253 = arith.addf %250, %252 : vector<8x128xf32>
    %254 = vector.extract_strided_slice %253 {offsets = [0, 0], sizes = [8, 96], strides = [1, 1]} : vector<8x128xf32> to vector<8x96xf32>
    %255 = arith.negf %254 : vector<8x96xf32>
    %256 = math.exp %255 : vector<8x96xf32>
    %cst_46 = arith.constant 1.000000e+00 : f32
    %257 = vector.broadcast %cst_46 : f32 to vector<8x96xf32>
    %258 = arith.addf %257, %256 : vector<8x96xf32>
    %259 = arith.divf %257, %258 : vector<8x96xf32>
    %260 = vector.extract_strided_slice %253 {offsets = [0, 96], sizes = [8, 32], strides = [1, 1]} : vector<8x128xf32> to vector<8x32xf32>
    %261 = math.tanh %260 : vector<8x32xf32>
    %262 = vector.extract_strided_slice %259 {offsets = [0, 0], sizes = [8, 32], strides = [1, 1]} : vector<8x96xf32> to vector<8x32xf32>
    %263 = vector.extract_strided_slice %259 {offsets = [0, 32], sizes = [8, 32], strides = [1, 1]} : vector<8x96xf32> to vector<8x32xf32>
    %264 = vector.extract_strided_slice %259 {offsets = [0, 64], sizes = [8, 32], strides = [1, 1]} : vector<8x96xf32> to vector<8x32xf32>
    %265 = arith.mulf %263, %247 : vector<8x32xf32>
    %266 = arith.mulf %262, %261 : vector<8x32xf32>
    %267 = arith.addf %265, %266 : vector<8x32xf32>
    %268 = math.tanh %267 : vector<8x32xf32>
    %269 = arith.mulf %264, %268 : vector<8x32xf32>
    %270 = vector.extract_strided_slice %187 {offsets = [32, 0], sizes = [8, 128], strides = [1, 1]} : vector<64x128xf32> to vector<8x128xf32>
    %271 = arith.truncf %269 : vector<8x32xf32> to vector<8x32xbf16>
    %cst_47 = arith.constant dense<0.000000e+00> : vector<8x128xf32>
    %272 = tpu.matmul %271, %181, %cst_47 {dimension_numbers = #tpu.dot_dimension_numbers<[1], [0], [0], [1], [0, 0, 1, 1], [], []>} : vector<8x32xbf16>, vector<32x128xbf16>, vector<8x128xf32> -> vector<8x128xf32>
    %273 = arith.addf %270, %272 : vector<8x128xf32>
    %274 = vector.extract_strided_slice %273 {offsets = [0, 0], sizes = [8, 96], strides = [1, 1]} : vector<8x128xf32> to vector<8x96xf32>
    %275 = arith.negf %274 : vector<8x96xf32>
    %276 = math.exp %275 : vector<8x96xf32>
    %cst_48 = arith.constant 1.000000e+00 : f32
    %277 = vector.broadcast %cst_48 : f32 to vector<8x96xf32>
    %278 = arith.addf %277, %276 : vector<8x96xf32>
    %279 = arith.divf %277, %278 : vector<8x96xf32>
    %280 = vector.extract_strided_slice %273 {offsets = [0, 96], sizes = [8, 32], strides = [1, 1]} : vector<8x128xf32> to vector<8x32xf32>
    %281 = math.tanh %280 : vector<8x32xf32>
    %282 = vector.extract_strided_slice %279 {offsets = [0, 0], sizes = [8, 32], strides = [1, 1]} : vector<8x96xf32> to vector<8x32xf32>
    %283 = vector.extract_strided_slice %279 {offsets = [0, 32], sizes = [8, 32], strides = [1, 1]} : vector<8x96xf32> to vector<8x32xf32>
    %284 = vector.extract_strided_slice %279 {offsets = [0, 64], sizes = [8, 32], strides = [1, 1]} : vector<8x96xf32> to vector<8x32xf32>
    %285 = arith.mulf %283, %267 : vector<8x32xf32>
    %286 = arith.mulf %282, %281 : vector<8x32xf32>
    %287 = arith.addf %285, %286 : vector<8x32xf32>
    %288 = math.tanh %287 : vector<8x32xf32>
    %289 = arith.mulf %284, %288 : vector<8x32xf32>
    %290 = vector.extract_strided_slice %187 {offsets = [40, 0], sizes = [8, 128], strides = [1, 1]} : vector<64x128xf32> to vector<8x128xf32>
    %291 = arith.truncf %289 : vector<8x32xf32> to vector<8x32xbf16>
    %cst_49 = arith.constant dense<0.000000e+00> : vector<8x128xf32>
    %292 = tpu.matmul %291, %181, %cst_49 {dimension_numbers = #tpu.dot_dimension_numbers<[1], [0], [0], [1], [0, 0, 1, 1], [], []>} : vector<8x32xbf16>, vector<32x128xbf16>, vector<8x128xf32> -> vector<8x128xf32>
    %293 = arith.addf %290, %292 : vector<8x128xf32>
    %294 = vector.extract_strided_slice %293 {offsets = [0, 0], sizes = [8, 96], strides = [1, 1]} : vector<8x128xf32> to vector<8x96xf32>
    %295 = arith.negf %294 : vector<8x96xf32>
    %296 = math.exp %295 : vector<8x96xf32>
    %cst_50 = arith.constant 1.000000e+00 : f32
    %297 = vector.broadcast %cst_50 : f32 to vector<8x96xf32>
    %298 = arith.addf %297, %296 : vector<8x96xf32>
    %299 = arith.divf %297, %298 : vector<8x96xf32>
    %300 = vector.extract_strided_slice %293 {offsets = [0, 96], sizes = [8, 32], strides = [1, 1]} : vector<8x128xf32> to vector<8x32xf32>
    %301 = math.tanh %300 : vector<8x32xf32>
    %302 = vector.extract_strided_slice %299 {offsets = [0, 0], sizes = [8, 32], strides = [1, 1]} : vector<8x96xf32> to vector<8x32xf32>
    %303 = vector.extract_strided_slice %299 {offsets = [0, 32], sizes = [8, 32], strides = [1, 1]} : vector<8x96xf32> to vector<8x32xf32>
    %304 = vector.extract_strided_slice %299 {offsets = [0, 64], sizes = [8, 32], strides = [1, 1]} : vector<8x96xf32> to vector<8x32xf32>
    %305 = arith.mulf %303, %287 : vector<8x32xf32>
    %306 = arith.mulf %302, %301 : vector<8x32xf32>
    %307 = arith.addf %305, %306 : vector<8x32xf32>
    %308 = math.tanh %307 : vector<8x32xf32>
    %309 = arith.mulf %304, %308 : vector<8x32xf32>
    %310 = vector.extract_strided_slice %187 {offsets = [48, 0], sizes = [8, 128], strides = [1, 1]} : vector<64x128xf32> to vector<8x128xf32>
    %311 = arith.truncf %309 : vector<8x32xf32> to vector<8x32xbf16>
    %cst_51 = arith.constant dense<0.000000e+00> : vector<8x128xf32>
    %312 = tpu.matmul %311, %181, %cst_51 {dimension_numbers = #tpu.dot_dimension_numbers<[1], [0], [0], [1], [0, 0, 1, 1], [], []>} : vector<8x32xbf16>, vector<32x128xbf16>, vector<8x128xf32> -> vector<8x128xf32>
    %313 = arith.addf %310, %312 : vector<8x128xf32>
    %314 = vector.extract_strided_slice %313 {offsets = [0, 0], sizes = [8, 96], strides = [1, 1]} : vector<8x128xf32> to vector<8x96xf32>
    %315 = arith.negf %314 : vector<8x96xf32>
    %316 = math.exp %315 : vector<8x96xf32>
    %cst_52 = arith.constant 1.000000e+00 : f32
    %317 = vector.broadcast %cst_52 : f32 to vector<8x96xf32>
    %318 = arith.addf %317, %316 : vector<8x96xf32>
    %319 = arith.divf %317, %318 : vector<8x96xf32>
    %320 = vector.extract_strided_slice %313 {offsets = [0, 96], sizes = [8, 32], strides = [1, 1]} : vector<8x128xf32> to vector<8x32xf32>
    %321 = math.tanh %320 : vector<8x32xf32>
    %322 = vector.extract_strided_slice %319 {offsets = [0, 0], sizes = [8, 32], strides = [1, 1]} : vector<8x96xf32> to vector<8x32xf32>
    %323 = vector.extract_strided_slice %319 {offsets = [0, 32], sizes = [8, 32], strides = [1, 1]} : vector<8x96xf32> to vector<8x32xf32>
    %324 = vector.extract_strided_slice %319 {offsets = [0, 64], sizes = [8, 32], strides = [1, 1]} : vector<8x96xf32> to vector<8x32xf32>
    %325 = arith.mulf %323, %307 : vector<8x32xf32>
    %326 = arith.mulf %322, %321 : vector<8x32xf32>
    %327 = arith.addf %325, %326 : vector<8x32xf32>
    %328 = math.tanh %327 : vector<8x32xf32>
    %329 = arith.mulf %324, %328 : vector<8x32xf32>
    %330 = vector.extract_strided_slice %187 {offsets = [56, 0], sizes = [8, 128], strides = [1, 1]} : vector<64x128xf32> to vector<8x128xf32>
    %331 = arith.truncf %329 : vector<8x32xf32> to vector<8x32xbf16>
    %cst_53 = arith.constant dense<0.000000e+00> : vector<8x128xf32>
    %332 = tpu.matmul %331, %181, %cst_53 {dimension_numbers = #tpu.dot_dimension_numbers<[1], [0], [0], [1], [0, 0, 1, 1], [], []>} : vector<8x32xbf16>, vector<32x128xbf16>, vector<8x128xf32> -> vector<8x128xf32>
    %333 = arith.addf %330, %332 : vector<8x128xf32>
    %334 = vector.extract_strided_slice %333 {offsets = [0, 0], sizes = [8, 96], strides = [1, 1]} : vector<8x128xf32> to vector<8x96xf32>
    %335 = arith.negf %334 : vector<8x96xf32>
    %336 = math.exp %335 : vector<8x96xf32>
    %cst_54 = arith.constant 1.000000e+00 : f32
    %337 = vector.broadcast %cst_54 : f32 to vector<8x96xf32>
    %338 = arith.addf %337, %336 : vector<8x96xf32>
    %339 = arith.divf %337, %338 : vector<8x96xf32>
    %340 = vector.extract_strided_slice %333 {offsets = [0, 96], sizes = [8, 32], strides = [1, 1]} : vector<8x128xf32> to vector<8x32xf32>
    %341 = math.tanh %340 : vector<8x32xf32>
    %342 = vector.extract_strided_slice %339 {offsets = [0, 0], sizes = [8, 32], strides = [1, 1]} : vector<8x96xf32> to vector<8x32xf32>
    %343 = vector.extract_strided_slice %339 {offsets = [0, 32], sizes = [8, 32], strides = [1, 1]} : vector<8x96xf32> to vector<8x32xf32>
    %344 = vector.extract_strided_slice %339 {offsets = [0, 64], sizes = [8, 32], strides = [1, 1]} : vector<8x96xf32> to vector<8x32xf32>
    %345 = arith.mulf %343, %327 : vector<8x32xf32>
    %346 = arith.mulf %342, %341 : vector<8x32xf32>
    %347 = arith.addf %345, %346 : vector<8x32xf32>
    %348 = math.tanh %347 : vector<8x32xf32>
    %349 = arith.mulf %344, %348 : vector<8x32xf32>
    %c0_55 = arith.constant 0 : index
    %c0_56 = arith.constant 0 : index
    %350 = vector.load %arg4[%c0_55, %c0_56] : memref<1x32xf32, #tpu.memory_space<vmem>>, vector<1x32xf32>
    %351 = vector.broadcast %350 : vector<1x32xf32> to vector<8x32xf32>
    %352 = arith.mulf %349, %351 : vector<8x32xf32>
    %cst_57 = arith.constant dense<0.000000e+00> : vector<8xf32>
    %353 = vector.multi_reduction <add>, %352, %cst_57 [1] : vector<8x32xf32> to vector<8xf32>
    %354 = vector.shape_cast %353 : vector<8xf32> to vector<8x1xf32>
    %c0_58 = arith.constant 0 : index
    %c0_59 = arith.constant 0 : index
    %355 = vector.load %arg5[%c0_58, %c0_59] : memref<1x1xf32, #tpu.memory_space<vmem>>, vector<1x1xf32>
    %356 = vector.broadcast %355 : vector<1x1xf32> to vector<8x1xf32>
    %357 = arith.addf %354, %356 : vector<8x1xf32>
    %358 = arith.negf %357 : vector<8x1xf32>
    %359 = math.exp %358 : vector<8x1xf32>
    %cst_60 = arith.constant 1.000000e+00 : f32
    %360 = vector.broadcast %cst_60 : f32 to vector<8x1xf32>
    %361 = arith.addf %360, %359 : vector<8x1xf32>
    %362 = arith.divf %360, %361 : vector<8x1xf32>
    %c0_61 = arith.constant 0 : index
    %c0_62 = arith.constant 0 : index
    %363 = vector.load %arg6[%c0_61, %c0_62] : memref<8x1xf32, #tpu.memory_space<vmem>>, vector<8x1xf32>
    tpu.vector_store %arg6[%c0_61, %c0_62], %362 {strides = array<i32>} : memref<8x1xf32, #tpu.memory_space<vmem>>, vector<8x1xf32>,
    return
  }
}

</mosaic_0001>

<llo_original>
// kernel: ililstm_forward.1
$region0: #{ililstm_forward.1}
  #allocation0 [shape = 'u32[]', space=smem, size = 0x4, offset = 0x4, fixed_abs, tag = 'smem constant byte address 0x4 - core index']
  #allocation1 [shape = 'u32[72,128]{1,0:T(1,128)}', space=vmem, size = 0x9000, scoped, tag = 'internal scratch']
  #allocation2 [shape = 'f32[1,1]{1,0:T(1,128)S(1)}', space=vmem, size = 0x200, scoped, tag = 'scoped memory for ililstm_forward.1']
  %s0 = inlined_call_operand.vmem [shape: f32[64,32], index: 0, kind: input, shape index: {}]
  %s1 = inlined_call_operand.vmem [shape: f32[2,32,128], index: 1, kind: input, shape index: {}]
  %s2 = inlined_call_operand.hbm [shape: f32[2,32,128], index: 2, kind: input, shape index: {}]
  %s3 = inlined_call_operand.vmem [shape: f32[2,1,128], index: 3, kind: input, shape index: {}]
  %s4 = inlined_call_operand.vmem [shape: f32[1,32], index: 4, kind: input, shape index: {}]
  %s5 = inlined_call_operand.<no memory space> [shape: f32[1,1], index: 5, kind: input, shape index: {}]
  %s6 = inlined_call_operand.vmem [shape: f32[8,1], index: 6, kind: output, shape index: {}]
  %s7 = sld [smem:[#allocation0]]
  $region38: #{ililstm_forward.1} parent=0
    _
  %s9 = ssub.s32 1, %s7
  %s10 = scalar_select 0, %s9, %s7
  %v11 = vstv %s5
  %12 = vst [vmem:[#allocation2] sm:$0x1] %v11
  $region1: #{ililstm_forward.1} parent=0
    #allocation3 [shape = 'u8[32768]{0}', space=vmem, size = 0x8000, scoped, tag = 'input window, operand 2, single buffered']
    #allocation4 [shape = 's32[1]{0}', space=sflag, size = 0x4, scoped, tag = 'scoped memory for ililstm_forward.1']
    %13 = vsyncpa [#allocation4], 0
    // Predicated region
    $region2: #{ililstm_forward.1} parent=1 // pred_check
      _
    $region3: #{ililstm_forward.1} parent=1 // pred_check_branch
      %15 = sbr.rel (0) target = $region5
    $region4: #{ililstm_forward.1} parent=1 // pred_region
      _
    $region5: #{ililstm_forward.1} parent=1 // pred_fallthru
      _
    // Predicated region
    $region6: #{ililstm_forward.1} parent=1 // pred_check
      _
    $region7: #{ililstm_forward.1} parent=1 // pred_check_branch
      %17 = sbr.rel (0) target = $region9
    $region8: #{ililstm_forward.1} parent=1 // pred_region
      _
    $region9: #{ililstm_forward.1} parent=1 // pred_fallthru
      _
    // Predicated region
    $region10: #{ililstm_forward.1} parent=1 // pred_check
      _
    $region11: #{ililstm_forward.1} parent=1 // pred_check_branch
      %19 = sbr.rel (0) target = $region13
    $region12: #{ililstm_forward.1} parent=1 // pred_region
      %21 = vsyncadd [#allocation4], 0
      %s22 = sshll.u32 %s2, 4
      %s23 = int_to_ptr.hbm [resolvable:$true] %s22
      %s24 = sshll.u32 [#allocation3], 4
      %s25 = int_to_ptr.vmem [resolvable:$true] %s24
      %30 = dma.hbm_to_vmem [thread:$0]  %s23, 1024, %s25, [#allocation4], 128, 128, 8
    $region13: #{ililstm_forward.1} parent=1 // pred_fallthru
      _
    // Predicated region
    $region14: #{ililstm_forward.1} parent=1 // pred_check
      _
    $region15: #{ililstm_forward.1} parent=1 // pred_check_branch
      %32 = sbr.rel (0) target = $region17
    $region16: #{ililstm_forward.1} parent=1 // pred_region
      _
    $region17: #{ililstm_forward.1} parent=1 // pred_fallthru
      _
    // Predicated region
    $region18: #{ililstm_forward.1} parent=1 // pred_check
      _
    $region19: #{ililstm_forward.1} parent=1 // pred_check_branch
      %34 = sbr.rel (0) target = $region21
    $region20: #{ililstm_forward.1} parent=1 // pred_region
      _
    $region21: #{ililstm_forward.1} parent=1 // pred_fallthru
      _
    // Predicated region
    $region22: #{ililstm_forward.1} parent=1 // pred_check
      _
    $region23: #{ililstm_forward.1} parent=1 // pred_check_branch
      %36 = sbr.rel (0) target = $region25
    $region24: #{ililstm_forward.1} parent=1 // pred_region
      _
    $region25: #{ililstm_forward.1} parent=1 // pred_fallthru
      _
    // Predicated region
    $region26: #{ililstm_forward.1} parent=1 // pred_check
      _
    $region27: #{ililstm_forward.1} parent=1 // pred_check_branch
      %38 = sbr.rel (0) target = $region29
    $region28: #{ililstm_forward.1} parent=1 // pred_region
      %40 = dma.done [#allocation4], 1024
    $region29: #{ililstm_forward.1} parent=1 // pred_fallthru
      _
    %v42 = vld [vmem:[%s0] sm:$0xff]
    %v43 = vld [vmem:[%s0 + $0x8] sm:$0xff]
    %v44 = vld [vmem:[%s0 + $0x10] sm:$0xff]
    %v45 = vld [vmem:[%s0 + $0x18] sm:$0xff]
    %v46 = vld [vmem:[%s0 + $0x20] sm:$0xff]
    %v47 = vld [vmem:[%s0 + $0x28] sm:$0xff]
    %v48 = vld [vmem:[%s0 + $0x30] sm:$0xff]
    %v49 = vld [vmem:[%s0 + $0x38] sm:$0xff]
    %v50 = vld [vmem:[%s1] sm:$0xff]
    %v51 = vld [vmem:[%s1 + $0x8] sm:$0xff]
    %v52 = vld [vmem:[%s1 + $0x10] sm:$0xff]
    %v53 = vld [vmem:[%s1 + $0x18] sm:$0xff]
    %v54 = vpack.c.bf16 %v51, %v50
    %v55 = vpack.c.bf16 %v53, %v52
    %v56 = vld [vmem:[#allocation3] sm:$0xff]
    %v57 = vld [vmem:[#allocation3 + $0x8] sm:$0xff]
    %v58 = vld [vmem:[#allocation3 + $0x10] sm:$0xff]
    %v59 = vld [vmem:[#allocation3 + $0x18] sm:$0xff]
    %v60 = vpack.c.bf16 %v57, %v56
    %v61 = vpack.c.bf16 %v59, %v58
    %v62 = vld [vmem:[%s3] sm:$0x1]
    %v63 = vpack.c.bf16 %v43, %v42
    %v64 = vpack.c.bf16 %v45, %v44
    %v65 = vpack.c.bf16 %v47, %v46
    %v66 = vpack.c.bf16 %v49, %v48
    %v68 = vperm.slane %v62, 0
    %vm70 = vcmask 261120
    %v72 = vsel %vm70, %v63, 0
    %v75 = vsel %vm70, %v64, 0
    %v78 = vsel %vm70, %v65, 0
    %v81 = vsel %vm70, %v66, 0
    %83 = vmatpush.bf16.msra.mxu0 0
    %84 = vmatpush.bf16.msra.mxu0 0
    %85 = vmatpush.bf16.msra.mxu0 0
    %86 = vmatpush.bf16.msra.mxu0 0
    %87 = vmatpush.bf16.msra.mxu0 0
    %88 = vmatpush.bf16.msra.mxu0 0
    %89 = vmatpush.bf16.msra.mxu0 %v55
    %90 = vmatpush.bf16.msra.mxu0 %v54
    %91 = vmatmul.bf16.gmra.mxu0 %v72
    %v92 = vpop.f32.mrf.mxu0
    %v93 = vadd.f32 %v68, %v92
    %v94 = vpop.f32.mrf.mxu0
    %v95 = vadd.f32 %v68, %v94
    %96 = vmatmul.bf16.gmra.mxu0 %v75
    %v97 = vpop.f32.mrf.mxu0
    %v98 = vadd.f32 %v68, %v97
    %v99 = vpop.f32.mrf.mxu0
    %v100 = vadd.f32 %v68, %v99
    %101 = vmatmul.bf16.gmra.mxu0 %v78
    %v102 = vpop.f32.mrf.mxu0
    %v103 = vadd.f32 %v68, %v102
    %v104 = vpop.f32.mrf.mxu0
    %v105 = vadd.f32 %v68, %v104
    %106 = vmatmul.bf16.gmra.mxu0 %v81
    %v107 = vpop.f32.mrf.mxu0
    %v108 = vadd.f32 %v68, %v107
    %v109 = vpop.f32.mrf.mxu0
    %v110 = vadd.f32 %v68, %v109
    %111 = vdwg.mxu0
    %v113 = vsel %vm70, 0, 0
    %115 = vmatpush.bf16.msra.mxu0 0
    %116 = vmatpush.bf16.msra.mxu0 0
    %117 = vmatpush.bf16.msra.mxu0 0
    %118 = vmatpush.bf16.msra.mxu0 0
    %119 = vmatpush.bf16.msra.mxu0 0
    %120 = vmatpush.bf16.msra.mxu0 0
    %121 = vmatpush.bf16.msra.mxu0 %v61
    %122 = vmatpush.bf16.msra.mxu0 %v60
    %123 = vmatmul.bf16.gmra.mxu0 %v113
    %v124 = vpop.f32.mrf.mxu0
    %v125 = vadd.f32 0.0, %v124
    %v126 = vpop.f32.mrf.mxu0
    %127 = vdwg.mxu0
    %v128 = vadd.f32 %v93, %v125
    %v129 = vxor.u32 %v128, 2147483648
    %v130 = vmul.f32 %v129, 1.442695
    %v131 = vpow.pop %v130
    %v132 = vadd.f32 %v131, 1.0
    %v133 = vrcp.pop %v132
    %v134 = vmul.f32 %v132, %v133
    %v135 = vsub.f32 1.0, %v134
    %v136 = vmul.f32 %v133, %v135
    %v137 = vadd.f32 %v133, %v136
    %vm138 = vweird.f32 %v132
    %vm139 = vweird.f32 %v133
    %vm140 = vmor %vm138, %vm139
    %v141 = vsel %vm140, %v133, %v137
    %v142 = vand.u32 2147483647, %v132
    %vm143 = vcmp.eq.f32.partialorder %v142, 8.507059e+37
    %v144 = vand.u32 %v132, 2147483648
    %v145 = vor.u32 1.1754944e-38, %v144
    %v146 = vsel %vm143, %v145, %v141
    %v147 = vmul.f32 1.0, %v146
    %v148 = vtanh.pop %v128
    %v149 = vmul.f32 %v147, 0.0
    %151 = vrot.lane.b32.xlu0 %v148, 32
    %v152 = vpop.permute.xlu0 %151
    %v154 = vmul.f32 %v147, %v152
    %156 = vrot.lane.b32.xlu0 %v154, 32
    %v157 = vpop.permute.xlu0 %156
    %v159 = vadd.f32 %v149, %v157
    %v160 = vtanh.pop %v159
    %162 = vrot.lane.b32.xlu0 %v160, 32
    %v163 = vpop.permute.xlu0 %162
    %v165 = vmul.f32 %v147, %v163
    %v166 = vpack.c.bf16 %v165, %v165
    %168 = vrot.lane.b32.xlu0 %v166, 64
    %v169 = vpop.permute.xlu0 %168
    %v171 = vsel %vm70, %v169, 0
    %173 = vmatpush.bf16.msra.mxu0 0
    %174 = vmatpush.bf16.msra.mxu0 0
    %175 = vmatpush.bf16.msra.mxu0 0
    %176 = vmatpush.bf16.msra.mxu0 0
    %177 = vmatpush.bf16.msra.mxu0 0
    %178 = vmatpush.bf16.msra.mxu0 0
    %179 = vmatpush.bf16.msra.mxu0 %v61
    %180 = vmatpush.bf16.msra.mxu0 %v60
    %181 = vmatmul.bf16.gmra.mxu0 %v171
    %v182 = vpop.f32.mrf.mxu0
    %v183 = vadd.f32 0.0, %v182
    %v184 = vpop.f32.mrf.mxu0
    %185 = vdwg.mxu0
    %v186 = vadd.f32 %v95, %v183
    %v187 = vxor.u32 %v186, 2147483648
    %v188 = vmul.f32 %v187, 1.442695
    %v189 = vpow.pop %v188
    %v190 = vadd.f32 %v189, 1.0
    %v191 = vrcp.pop %v190
    %v192 = vmul.f32 %v190, %v191
    %v193 = vsub.f32 1.0, %v192
    %v194 = vmul.f32 %v191, %v193
    %v195 = vadd.f32 %v191, %v194
    %vm196 = vweird.f32 %v190
    %vm197 = vweird.f32 %v191
    %vm198 = vmor %vm196, %vm197
    %v199 = vsel %vm198, %v191, %v195
    %v200 = vand.u32 2147483647, %v190
    %vm201 = vcmp.eq.f32.partialorder %v200, 8.507059e+37
    %v202 = vand.u32 %v190, 2147483648
    %v203 = vor.u32 1.1754944e-38, %v202
    %v204 = vsel %vm201, %v203, %v199
    %v205 = vmul.f32 1.0, %v204
    %v206 = vtanh.pop %v186
    %v207 = vmul.f32 %v205, %v159
    %209 = vrot.lane.b32.xlu0 %v206, 32
    %v210 = vpop.permute.xlu0 %209
    %v212 = vmul.f32 %v205, %v210
    %214 = vrot.lane.b32.xlu0 %v212, 32
    %v215 = vpop.permute.xlu0 %214
    %v217 = vadd.f32 %v207, %v215
    %v218 = vtanh.pop %v217
    %220 = vrot.lane.b32.xlu0 %v218, 32
    %v221 = vpop.permute.xlu0 %220
    %v223 = vmul.f32 %v205, %v221
    %v224 = vpack.c.bf16 %v223, %v223
    %226 = vrot.lane.b32.xlu0 %v224, 64
    %v227 = vpop.permute.xlu0 %226
    %v229 = vsel %vm70, %v227, 0
    %231 = vmatpush.bf16.msra.mxu0 0
    %232 = vmatpush.bf16.msra.mxu0 0
    %233 = vmatpush.bf16.msra.mxu0 0
    %234 = vmatpush.bf16.msra.mxu0 0
    %235 = vmatpush.bf16.msra.mxu0 0
    %236 = vmatpush.bf16.msra.mxu0 0
    %237 = vmatpush.bf16.msra.mxu0 %v61
    %238 = vmatpush.bf16.msra.mxu0 %v60
    %239 = vmatmul.bf16.gmra.mxu0 %v229
    %v240 = vpop.f32.mrf.mxu0
    %v241 = vadd.f32 0.0, %v240
    %v242 = vpop.f32.mrf.mxu0
    %243 = vdwg.mxu0
    %v244 = vadd.f32 %v98, %v241
    %v245 = vxor.u32 %v244, 2147483648
    %v246 = vmul.f32 %v245, 1.442695
    %v247 = vpow.pop %v246
    %v248 = vadd.f32 %v247, 1.0
    %v249 = vrcp.pop %v248
    %v250 = vmul.f32 %v248, %v249
    %v251 = vsub.f32 1.0, %v250
    %v252 = vmul.f32 %v249, %v251
    %v253 = vadd.f32 %v249, %v252
    %vm254 = vweird.f32 %v248
    %vm255 = vweird.f32 %v249
    %vm256 = vmor %vm254, %vm255
    %v257 = vsel %vm256, %v249, %v253
    %v258 = vand.u32 2147483647, %v248
    %vm259 = vcmp.eq.f32.partialorder %v258, 8.507059e+37
    %v260 = vand.u32 %v248, 2147483648
    %v261 = vor.u32 1.1754944e-38, %v260
    %v262 = vsel %vm259, %v261, %v257
    %v263 = vmul.f32 1.0, %v262
    %v264 = vtanh.pop %v244
    %v265 = vmul.f32 %v263, %v217
    %267 = vrot.lane.b32.xlu0 %v264, 32
    %v268 = vpop.permute.xlu0 %267
    %v270 = vmul.f32 %v263, %v268
    %272 = vrot.lane.b32.xlu0 %v270, 32
    %v273 = vpop.permute.xlu0 %272
    %v275 = vadd.f32 %v265, %v273
    %v276 = vtanh.pop %v275
    %278 = vrot.lane.b32.xlu0 %v276, 32
    %v279 = vpop.permute.xlu0 %278
    %v281 = vmul.f32 %v263, %v279
    %v282 = vpack.c.bf16 %v281, %v281
    %284 = vrot.lane.b32.xlu0 %v282, 64
    %v285 = vpop.permute.xlu0 %284
    %v287 = vsel %vm70, %v285, 0
    %289 = vmatpush.bf16.msra.mxu0 0
    %290 = vmatpush.bf16.msra.mxu0 0
    %291 = vmatpush.bf16.msra.mxu0 0
    %292 = vmatpush.bf16.msra.mxu0 0
    %293 = vmatpush.bf16.msra.mxu0 0
    %294 = vmatpush.bf16.msra.mxu0 0
    %295 = vmatpush.bf16.msra.mxu0 %v61
    %296 = vmatpush.bf16.msra.mxu0 %v60
    %297 = vmatmul.bf16.gmra.mxu0 %v287
    %v298 = vpop.f32.mrf.mxu0
    %v299 = vadd.f32 0.0, %v298
    %v300 = vpop.f32.mrf.mxu0
    %301 = vdwg.mxu0
    %v302 = vadd.f32 %v100, %v299
    %v303 = vxor.u32 %v302, 2147483648
    %v304 = vmul.f32 %v303, 1.442695
    %v305 = vpow.pop %v304
    %v306 = vadd.f32 %v305, 1.0
    %v307 = vrcp.pop %v306
    %v308 = vmul.f32 %v306, %v307
    %v309 = vsub.f32 1.0, %v308
    %v310 = vmul.f32 %v307, %v309
    %v311 = vadd.f32 %v307, %v310
    %vm312 = vweird.f32 %v306
    %vm313 = vweird.f32 %v307
    %vm314 = vmor %vm312, %vm313
    %v315 = vsel %vm314, %v307, %v311
    %v316 = vand.u32 2147483647, %v306
    %vm317 = vcmp.eq.f32.partialorder %v316, 8.507059e+37
    %v318 = vand.u32 %v306, 2147483648
    %v319 = vor.u32 1.1754944e-38, %v318
    %v320 = vsel %vm317, %v319, %v315
    %v321 = vmul.f32 1.0, %v320
    %v322 = vtanh.pop %v302
    %v323 = vmul.f32 %v321, %v275
    %325 = vrot.lane.b32.xlu0 %v322, 32
    %v326 = vpop.permute.xlu0 %325
    %v328 = vmul.f32 %v321, %v326
    %330 = vrot.lane.b32.xlu0 %v328, 32
    %v331 = vpop.permute.xlu0 %330
    %v333 = vadd.f32 %v323, %v331
    %v334 = vtanh.pop %v333
    %336 = vrot.lane.b32.xlu0 %v334, 32
    %v337 = vpop.permute.xlu0 %336
    %v339 = vmul.f32 %v321, %v337
    %v340 = vpack.c.bf16 %v339, %v339
    %342 = vrot.lane.b32.xlu0 %v340, 64
    %v343 = vpop.permute.xlu0 %342
    %v345 = vsel %vm70, %v343, 0
    %347 = vmatpush.bf16.msra.mxu0 0
    %348 = vmatpush.bf16.msra.mxu0 0
    %349 = vmatpush.bf16.msra.mxu0 0
    %350 = vmatpush.bf16.msra.mxu0 0
    %351 = vmatpush.bf16.msra.mxu0 0
    %352 = vmatpush.bf16.msra.mxu0 0
    %353 = vmatpush.bf16.msra.mxu0 %v61
    %354 = vmatpush.bf16.msra.mxu0 %v60
    %355 = vmatmul.bf16.gmra.mxu0 %v345
    %v356 = vpop.f32.mrf.mxu0
    %v357 = vadd.f32 0.0, %v356
    %v358 = vpop.f32.mrf.mxu0
    %359 = vdwg.mxu0
    %v360 = vadd.f32 %v103, %v357
    %v361 = vxor.u32 %v360, 2147483648
    %v362 = vmul.f32 %v361, 1.442695
    %v363 = vpow.pop %v362
    %v364 = vadd.f32 %v363, 1.0
    %v365 = vrcp.pop %v364
    %v366 = vmul.f32 %v364, %v365
    %v367 = vsub.f32 1.0, %v366
    %v368 = vmul.f32 %v365, %v367
    %v369 = vadd.f32 %v365, %v368
    %vm370 = vweird.f32 %v364
    %vm371 = vweird.f32 %v365
    %vm372 = vmor %vm370, %vm371
    %v373 = vsel %vm372, %v365, %v369
    %v374 = vand.u32 2147483647, %v364
    %vm375 = vcmp.eq.f32.partialorder %v374, 8.507059e+37
    %v376 = vand.u32 %v364, 2147483648
    %v377 = vor.u32 1.1754944e-38, %v376
    %v378 = vsel %vm375, %v377, %v373
    %v379 = vmul.f32 1.0, %v378
    %v380 = vtanh.pop %v360
    %v381 = vmul.f32 %v379, %v333
    %383 = vrot.lane.b32.xlu0 %v380, 32
    %v384 = vpop.permute.xlu0 %383
    %v386 = vmul.f32 %v379, %v384
    %388 = vrot.lane.b32.xlu0 %v386, 32
    %v389 = vpop.permute.xlu0 %388
    %v391 = vadd.f32 %v381, %v389
    %v392 = vtanh.pop %v391
    %394 = vrot.lane.b32.xlu0 %v392, 32
    %v395 = vpop.permute.xlu0 %394
    %v397 = vmul.f32 %v379, %v395
    %v398 = vpack.c.bf16 %v397, %v397
    %400 = vrot.lane.b32.xlu0 %v398, 64
    %v401 = vpop.permute.xlu0 %400
    %v403 = vsel %vm70, %v401, 0
    %405 = vmatpush.bf16.msra.mxu0 0
    %406 = vmatpush.bf16.msra.mxu0 0
    %407 = vmatpush.bf16.msra.mxu0 0
    %408 = vmatpush.bf16.msra.mxu0 0
    %409 = vmatpush.bf16.msra.mxu0 0
    %410 = vmatpush.bf16.msra.mxu0 0
    %411 = vmatpush.bf16.msra.mxu0 %v61
    %412 = vmatpush.bf16.msra.mxu0 %v60
    %413 = vmatmul.bf16.gmra.mxu0 %v403
    %v414 = vpop.f32.mrf.mxu0
    %v415 = vadd.f32 0.0, %v414
    %v416 = vpop.f32.mrf.mxu0
    %417 = vdwg.mxu0
    %v418 = vadd.f32 %v105, %v415
    %v419 = vxor.u32 %v418, 2147483648
    %v420 = vmul.f32 %v419, 1.442695
    %v421 = vpow.pop %v420
    %v422 = vadd.f32 %v421, 1.0
    %v423 = vrcp.pop %v422
    %v424 = vmul.f32 %v422, %v423
    %v425 = vsub.f32 1.0, %v424
    %v426 = vmul.f32 %v423, %v425
    %v427 = vadd.f32 %v423, %v426
    %vm428 = vweird.f32 %v422
    %vm429 = vweird.f32 %v423
    %vm430 = vmor %vm428, %vm429
    %v431 = vsel %vm430, %v423, %v427
    %v432 = vand.u32 2147483647, %v422
    %vm433 = vcmp.eq.f32.partialorder %v432, 8.507059e+37
    %v434 = vand.u32 %v422, 2147483648
    %v435 = vor.u32 1.1754944e-38, %v434
    %v436 = vsel %vm433, %v435, %v431
    %v437 = vmul.f32 1.0, %v436
    %v438 = vtanh.pop %v418
    %v439 = vmul.f32 %v437, %v391
    %441 = vrot.lane.b32.xlu0 %v438, 32
    %v442 = vpop.permute.xlu0 %441
    %v444 = vmul.f32 %v437, %v442
    %446 = vrot.lane.b32.xlu0 %v444, 32
    %v447 = vpop.permute.xlu0 %446
    %v449 = vadd.f32 %v439, %v447
    %v450 = vtanh.pop %v449
    %452 = vrot.lane.b32.xlu0 %v450, 32
    %v453 = vpop.permute.xlu0 %452
    %v455 = vmul.f32 %v437, %v453
    %v456 = vpack.c.bf16 %v455, %v455
    %458 = vrot.lane.b32.xlu0 %v456, 64
    %v459 = vpop.permute.xlu0 %458
    %v461 = vsel %vm70, %v459, 0
    %463 = vmatpush.bf16.msra.mxu0 0
    %464 = vmatpush.bf16.msra.mxu0 0
    %465 = vmatpush.bf16.msra.mxu0 0
    %466 = vmatpush.bf16.msra.mxu0 0
    %467 = vmatpush.bf16.msra.mxu0 0
    %468 = vmatpush.bf16.msra.mxu0 0
    %469 = vmatpush.bf16.msra.mxu0 %v61
    %470 = vmatpush.bf16.msra.mxu0 %v60
    %471 = vmatmul.bf16.gmra.mxu0 %v461
    %v472 = vpop.f32.mrf.mxu0
    %v473 = vadd.f32 0.0, %v472
    %v474 = vpop.f32.mrf.mxu0
    %475 = vdwg.mxu0
    %v476 = vadd.f32 %v108, %v473
    %v477 = vxor.u32 %v476, 2147483648
    %v478 = vmul.f32 %v477, 1.442695
    %v479 = vpow.pop %v478
    %v480 = vadd.f32 %v479, 1.0
    %v481 = vrcp.pop %v480
    %v482 = vmul.f32 %v480, %v481
    %v483 = vsub.f32 1.0, %v482
    %v484 = vmul.f32 %v481, %v483
    %v485 = vadd.f32 %v481, %v484
    %vm486 = vweird.f32 %v480
    %vm487 = vweird.f32 %v481
    %vm488 = vmor %vm486, %vm487
    %v489 = vsel %vm488, %v481, %v485
    %v490 = vand.u32 2147483647, %v480
    %vm491 = vcmp.eq.f32.partialorder %v490, 8.507059e+37
    %v492 = vand.u32 %v480, 2147483648
    %v493 = vor.u32 1.1754944e-38, %v492
    %v494 = vsel %vm491, %v493, %v489
    %v495 = vmul.f32 1.0, %v494
    %v496 = vtanh.pop %v476
    %v497 = vmul.f32 %v495, %v449
    %499 = vrot.lane.b32.xlu0 %v496, 32
    %v500 = vpop.permute.xlu0 %499
    %v502 = vmul.f32 %v495, %v500
    %504 = vrot.lane.b32.xlu0 %v502, 32
    %v505 = vpop.permute.xlu0 %504
    %v507 = vadd.f32 %v497, %v505
    %v508 = vtanh.pop %v507
    %510 = vrot.lane.b32.xlu0 %v508, 32
    %v511 = vpop.permute.xlu0 %510
    %v513 = vmul.f32 %v495, %v511
    %v514 = vpack.c.bf16 %v513, %v513
    %516 = vrot.lane.b32.xlu0 %v514, 64
    %v517 = vpop.permute.xlu0 %516
    %v519 = vsel %vm70, %v517, 0
    %521 = vmatpush.bf16.msra.mxu0 0
    %522 = vmatpush.bf16.msra.mxu0 0
    %523 = vmatpush.bf16.msra.mxu0 0
    %524 = vmatpush.bf16.msra.mxu0 0
    %525 = vmatpush.bf16.msra.mxu0 0
    %526 = vmatpush.bf16.msra.mxu0 0
    %527 = vmatpush.bf16.msra.mxu0 %v61
    %528 = vmatpush.bf16.msra.mxu0 %v60
    %529 = vmatmul.bf16.gmra.mxu0 %v519
    %v530 = vpop.f32.mrf.mxu0
    %v531 = vadd.f32 0.0, %v530
    %v532 = vpop.f32.mrf.mxu0
    %533 = vdwg.mxu0
    %v534 = vadd.f32 %v110, %v531
    %v535 = vxor.u32 %v534, 2147483648
    %v536 = vmul.f32 %v535, 1.442695
    %v537 = vpow.pop %v536
    %v538 = vadd.f32 %v537, 1.0
    %v539 = vrcp.pop %v538
    %v540 = vmul.f32 %v538, %v539
    %v541 = vsub.f32 1.0, %v540
    %v542 = vmul.f32 %v539, %v541
    %v543 = vadd.f32 %v539, %v542
    %vm544 = vweird.f32 %v538
    %vm545 = vweird.f32 %v539
    %vm546 = vmor %vm544, %vm545
    %v547 = vsel %vm546, %v539, %v543
    %v548 = vand.u32 2147483647, %v538
    %vm549 = vcmp.eq.f32.partialorder %v548, 8.507059e+37
    %v550 = vand.u32 %v538, 2147483648
    %v551 = vor.u32 1.1754944e-38, %v550
    %v552 = vsel %vm549, %v551, %v547
    %v553 = vmul.f32 1.0, %v552
    %v554 = vtanh.pop %v534
    %v555 = vmul.f32 %v553, %v507
    %557 = vrot.lane.b32.xlu0 %v554, 32
    %v558 = vpop.permute.xlu0 %557
    %v560 = vmul.f32 %v553, %v558
    %562 = vrot.lane.b32.xlu0 %v560, 32
    %v563 = vpop.permute.xlu0 %562
    %v565 = vadd.f32 %v555, %v563
    %v566 = vtanh.pop %v565
    %568 = vrot.lane.b32.xlu0 %v566, 32
    %v569 = vpop.permute.xlu0 %568
    %v571 = vmul.f32 %v553, %v569
    %s572 = scalar_lea.vmem %s1, 32
    %v573 = vld [vmem:[%s572] sm:$0xff]
    %v574 = vld [vmem:[%s572 + $0x8] sm:$0xff]
    %v575 = vld [vmem:[%s572 + $0x10] sm:$0xff]
    %v576 = vld [vmem:[%s572 + $0x18] sm:$0xff]
    %v577 = vpack.c.bf16 %v574, %v573
    %v578 = vpack.c.bf16 %v576, %v575
    %s579 = scalar_lea.vmem [#allocation3], 32
    %v580 = vld [vmem:[%s579] sm:$0xff]
    %v581 = vld [vmem:[%s579 + $0x8] sm:$0xff]
    %v582 = vld [vmem:[%s579 + $0x10] sm:$0xff]
    %v583 = vld [vmem:[%s579 + $0x18] sm:$0xff]
    %v584 = vpack.c.bf16 %v581, %v580
    %v585 = vpack.c.bf16 %v583, %v582
    %s586 = scalar_lea.vmem %s3, 1
    %v587 = vld [vmem:[%s586] sm:$0x1]
    %v588 = vpack.c.bf16 %v223, %v165
    %v589 = vpack.c.bf16 %v339, %v281
    %v590 = vpack.c.bf16 %v455, %v397
    %v591 = vpack.c.bf16 %v571, %v513
    %v593 = vperm.slane %v587, 0
    %599 = vrot.lane.b32.xlu0 %v588, 64
    %v600 = vpop.permute.xlu0 %599
    %601 = vrot.lane.b32.xlu0 %v589, 64
    %v602 = vpop.permute.xlu0 %601
    %603 = vrot.lane.b32.xlu0 %v590, 64
    %v604 = vpop.permute.xlu0 %603
    %605 = vrot.lane.b32.xlu0 %v591, 64
    %v606 = vpop.permute.xlu0 %605
    %v608 = vsel %vm70, %v600, 0
    %v611 = vsel %vm70, %v602, 0
    %v614 = vsel %vm70, %v604, 0
    %v617 = vsel %vm70, %v606, 0
    %619 = vmatpush.bf16.msra.mxu0 0
    %620 = vmatpush.bf16.msra.mxu0 0
    %621 = vmatpush.bf16.msra.mxu0 0
    %622 = vmatpush.bf16.msra.mxu0 0
    %623 = vmatpush.bf16.msra.mxu0 0
    %624 = vmatpush.bf16.msra.mxu0 0
    %625 = vmatpush.bf16.msra.mxu0 %v578
    %626 = vmatpush.bf16.msra.mxu0 %v577
    %627 = vmatmul.bf16.gmra.mxu0 %v608
    %v628 = vpop.f32.mrf.mxu0
    %v629 = vadd.f32 %v593, %v628
    %v630 = vpop.f32.mrf.mxu0
    %v631 = vadd.f32 %v593, %v630
    %632 = vmatmul.bf16.gmra.mxu0 %v611
    %v633 = vpop.f32.mrf.mxu0
    %v634 = vadd.f32 %v593, %v633
    %v635 = vpop.f32.mrf.mxu0
    %v636 = vadd.f32 %v593, %v635
    %637 = vmatmul.bf16.gmra.mxu0 %v614
    %v638 = vpop.f32.mrf.mxu0
    %v639 = vadd.f32 %v593, %v638
    %v640 = vpop.f32.mrf.mxu0
    %v641 = vadd.f32 %v593, %v640
    %642 = vmatmul.bf16.gmra.mxu0 %v617
    %v643 = vpop.f32.mrf.mxu0
    %v644 = vadd.f32 %v593, %v643
    %v645 = vpop.f32.mrf.mxu0
    %v646 = vadd.f32 %v593, %v645
    %647 = vdwg.mxu0
    %648 = vmatpush.bf16.msra.mxu0 0
    %649 = vmatpush.bf16.msra.mxu0 0
    %650 = vmatpush.bf16.msra.mxu0 0
    %651 = vmatpush.bf16.msra.mxu0 0
    %652 = vmatpush.bf16.msra.mxu0 0
    %653 = vmatpush.bf16.msra.mxu0 0
    %654 = vmatpush.bf16.msra.mxu0 %v585
    %655 = vmatpush.bf16.msra.mxu0 %v584
    %656 = vmatmul.bf16.gmra.mxu0 %v113
    %v657 = vpop.f32.mrf.mxu0
    %v658 = vadd.f32 0.0, %v657
    %v659 = vpop.f32.mrf.mxu0
    %660 = vdwg.mxu0
    %v661 = vadd.f32 %v629, %v658
    %v662 = vxor.u32 %v661, 2147483648
    %v663 = vmul.f32 %v662, 1.442695
    %v664 = vpow.pop %v663
    %v665 = vadd.f32 %v664, 1.0
    %v666 = vrcp.pop %v665
    %v667 = vmul.f32 %v665, %v666
    %v668 = vsub.f32 1.0, %v667
    %v669 = vmul.f32 %v666, %v668
    %v670 = vadd.f32 %v666, %v669
    %vm671 = vweird.f32 %v665
    %vm672 = vweird.f32 %v666
    %vm673 = vmor %vm671, %vm672
    %v674 = vsel %vm673, %v666, %v670
    %v675 = vand.u32 2147483647, %v665
    %vm676 = vcmp.eq.f32.partialorder %v675, 8.507059e+37
    %v677 = vand.u32 %v665, 2147483648
    %v678 = vor.u32 1.1754944e-38, %v677
    %v679 = vsel %vm676, %v678, %v674
    %v680 = vmul.f32 1.0, %v679
    %v681 = vtanh.pop %v661
    %v682 = vmul.f32 %v680, 0.0
    %684 = vrot.lane.b32.xlu0 %v681, 32
    %v685 = vpop.permute.xlu0 %684
    %v687 = vmul.f32 %v680, %v685
    %689 = vrot.lane.b32.xlu0 %v687, 32
    %v690 = vpop.permute.xlu0 %689
    %v692 = vadd.f32 %v682, %v690
    %v693 = vtanh.pop %v692
    %695 = vrot.lane.b32.xlu0 %v693, 32
    %v696 = vpop.permute.xlu0 %695
    %v698 = vmul.f32 %v680, %v696
    %v699 = vpack.c.bf16 %v698, %v698
    %701 = vrot.lane.b32.xlu0 %v699, 64
    %v702 = vpop.permute.xlu0 %701
    %v704 = vsel %vm70, %v702, 0
    %706 = vmatpush.bf16.msra.mxu0 0
    %707 = vmatpush.bf16.msra.mxu0 0
    %708 = vmatpush.bf16.msra.mxu0 0
    %709 = vmatpush.bf16.msra.mxu0 0
    %710 = vmatpush.bf16.msra.mxu0 0
    %711 = vmatpush.bf16.msra.mxu0 0
    %712 = vmatpush.bf16.msra.mxu0 %v585
    %713 = vmatpush.bf16.msra.mxu0 %v584
    %714 = vmatmul.bf16.gmra.mxu0 %v704
    %v715 = vpop.f32.mrf.mxu0
    %v716 = vadd.f32 0.0, %v715
    %v717 = vpop.f32.mrf.mxu0
    %718 = vdwg.mxu0
    %v719 = vadd.f32 %v631, %v716
    %v720 = vxor.u32 %v719, 2147483648
    %v721 = vmul.f32 %v720, 1.442695
    %v722 = vpow.pop %v721
    %v723 = vadd.f32 %v722, 1.0
    %v724 = vrcp.pop %v723
    %v725 = vmul.f32 %v723, %v724
    %v726 = vsub.f32 1.0, %v725
    %v727 = vmul.f32 %v724, %v726
    %v728 = vadd.f32 %v724, %v727
    %vm729 = vweird.f32 %v723
    %vm730 = vweird.f32 %v724
    %vm731 = vmor %vm729, %vm730
    %v732 = vsel %vm731, %v724, %v728
    %v733 = vand.u32 2147483647, %v723
    %vm734 = vcmp.eq.f32.partialorder %v733, 8.507059e+37
    %v735 = vand.u32 %v723, 2147483648
    %v736 = vor.u32 1.1754944e-38, %v735
    %v737 = vsel %vm734, %v736, %v732
    %v738 = vmul.f32 1.0, %v737
    %v739 = vtanh.pop %v719
    %v740 = vmul.f32 %v738, %v692
    %742 = vrot.lane.b32.xlu0 %v739, 32
    %v743 = vpop.permute.xlu0 %742
    %v745 = vmul.f32 %v738, %v743
    %747 = vrot.lane.b32.xlu0 %v745, 32
    %v748 = vpop.permute.xlu0 %747
    %v750 = vadd.f32 %v740, %v748
    %v751 = vtanh.pop %v750
    %753 = vrot.lane.b32.xlu0 %v751, 32
    %v754 = vpop.permute.xlu0 %753
    %v756 = vmul.f32 %v738, %v754
    %v757 = vpack.c.bf16 %v756, %v756
    %759 = vrot.lane.b32.xlu0 %v757, 64
    %v760 = vpop.permute.xlu0 %759
    %v762 = vsel %vm70, %v760, 0
    %764 = vmatpush.bf16.msra.mxu0 0
    %765 = vmatpush.bf16.msra.mxu0 0
    %766 = vmatpush.bf16.msra.mxu0 0
    %767 = vmatpush.bf16.msra.mxu0 0
    %768 = vmatpush.bf16.msra.mxu0 0
    %769 = vmatpush.bf16.msra.mxu0 0
    %770 = vmatpush.bf16.msra.mxu0 %v585
    %771 = vmatpush.bf16.msra.mxu0 %v584
    %772 = vmatmul.bf16.gmra.mxu0 %v762
    %v773 = vpop.f32.mrf.mxu0
    %v774 = vadd.f32 0.0, %v773
    %v775 = vpop.f32.mrf.mxu0
    %776 = vdwg.mxu0
    %v777 = vadd.f32 %v634, %v774
    %v778 = vxor.u32 %v777, 2147483648
    %v779 = vmul.f32 %v778, 1.442695
    %v780 = vpow.pop %v779
    %v781 = vadd.f32 %v780, 1.0
    %v782 = vrcp.pop %v781
    %v783 = vmul.f32 %v781, %v782
    %v784 = vsub.f32 1.0, %v783
    %v785 = vmul.f32 %v782, %v784
    %v786 = vadd.f32 %v782, %v785
    %vm787 = vweird.f32 %v781
    %vm788 = vweird.f32 %v782
    %vm789 = vmor %vm787, %vm788
    %v790 = vsel %vm789, %v782, %v786
    %v791 = vand.u32 2147483647, %v781
    %vm792 = vcmp.eq.f32.partialorder %v791, 8.507059e+37
    %v793 = vand.u32 %v781, 2147483648
    %v794 = vor.u32 1.1754944e-38, %v793
    %v795 = vsel %vm792, %v794, %v790
    %v796 = vmul.f32 1.0, %v795
    %v797 = vtanh.pop %v777
    %v798 = vmul.f32 %v796, %v750
    %800 = vrot.lane.b32.xlu0 %v797, 32
    %v801 = vpop.permute.xlu0 %800
    %v803 = vmul.f32 %v796, %v801
    %805 = vrot.lane.b32.xlu0 %v803, 32
    %v806 = vpop.permute.xlu0 %805
    %v808 = vadd.f32 %v798, %v806
    %v809 = vtanh.pop %v808
    %811 = vrot.lane.b32.xlu0 %v809, 32
    %v812 = vpop.permute.xlu0 %811
    %v814 = vmul.f32 %v796, %v812
    %v815 = vpack.c.bf16 %v814, %v814
    %817 = vrot.lane.b32.xlu0 %v815, 64
    %v818 = vpop.permute.xlu0 %817
    %v820 = vsel %vm70, %v818, 0
    %822 = vmatpush.bf16.msra.mxu0 0
    %823 = vmatpush.bf16.msra.mxu0 0
    %824 = vmatpush.bf16.msra.mxu0 0
    %825 = vmatpush.bf16.msra.mxu0 0
    %826 = vmatpush.bf16.msra.mxu0 0
    %827 = vmatpush.bf16.msra.mxu0 0
    %828 = vmatpush.bf16.msra.mxu0 %v585
    %829 = vmatpush.bf16.msra.mxu0 %v584
    %830 = vmatmul.bf16.gmra.mxu0 %v820
    %v831 = vpop.f32.mrf.mxu0
    %v832 = vadd.f32 0.0, %v831
    %v833 = vpop.f32.mrf.mxu0
    %834 = vdwg.mxu0
    %v835 = vadd.f32 %v636, %v832
    %v836 = vxor.u32 %v835, 2147483648
    %v837 = vmul.f32 %v836, 1.442695
    %v838 = vpow.pop %v837
    %v839 = vadd.f32 %v838, 1.0
    %v840 = vrcp.pop %v839
    %v841 = vmul.f32 %v839, %v840
    %v842 = vsub.f32 1.0, %v841
    %v843 = vmul.f32 %v840, %v842
    %v844 = vadd.f32 %v840, %v843
    %vm845 = vweird.f32 %v839
    %vm846 = vweird.f32 %v840
    %vm847 = vmor %vm845, %vm846
    %v848 = vsel %vm847, %v840, %v844
    %v849 = vand.u32 2147483647, %v839
    %vm850 = vcmp.eq.f32.partialorder %v849, 8.507059e+37
    %v851 = vand.u32 %v839, 2147483648
    %v852 = vor.u32 1.1754944e-38, %v851
    %v853 = vsel %vm850, %v852, %v848
    %v854 = vmul.f32 1.0, %v853
    %v855 = vtanh.pop %v835
    %v856 = vmul.f32 %v854, %v808
    %858 = vrot.lane.b32.xlu0 %v855, 32
    %v859 = vpop.permute.xlu0 %858
    %v861 = vmul.f32 %v854, %v859
    %863 = vrot.lane.b32.xlu0 %v861, 32
    %v864 = vpop.permute.xlu0 %863
    %v866 = vadd.f32 %v856, %v864
    %v867 = vtanh.pop %v866
    %869 = vrot.lane.b32.xlu0 %v867, 32
    %v870 = vpop.permute.xlu0 %869
    %v872 = vmul.f32 %v854, %v870
    %v873 = vpack.c.bf16 %v872, %v872
    %875 = vrot.lane.b32.xlu0 %v873, 64
    %v876 = vpop.permute.xlu0 %875
    %v878 = vsel %vm70, %v876, 0
    %880 = vmatpush.bf16.msra.mxu0 0
    %881 = vmatpush.bf16.msra.mxu0 0
    %882 = vmatpush.bf16.msra.mxu0 0
    %883 = vmatpush.bf16.msra.mxu0 0
    %884 = vmatpush.bf16.msra.mxu0 0
    %885 = vmatpush.bf16.msra.mxu0 0
    %886 = vmatpush.bf16.msra.mxu0 %v585
    %887 = vmatpush.bf16.msra.mxu0 %v584
    %888 = vmatmul.bf16.gmra.mxu0 %v878
    %v889 = vpop.f32.mrf.mxu0
    %v890 = vadd.f32 0.0, %v889
    %v891 = vpop.f32.mrf.mxu0
    %892 = vdwg.mxu0
    %v893 = vadd.f32 %v639, %v890
    %v894 = vxor.u32 %v893, 2147483648
    %v895 = vmul.f32 %v894, 1.442695
    %v896 = vpow.pop %v895
    %v897 = vadd.f32 %v896, 1.0
    %v898 = vrcp.pop %v897
    %v899 = vmul.f32 %v897, %v898
    %v900 = vsub.f32 1.0, %v899
    %v901 = vmul.f32 %v898, %v900
    %v902 = vadd.f32 %v898, %v901
    %vm903 = vweird.f32 %v897
    %vm904 = vweird.f32 %v898
    %vm905 = vmor %vm903, %vm904
    %v906 = vsel %vm905, %v898, %v902
    %v907 = vand.u32 2147483647, %v897
    %vm908 = vcmp.eq.f32.partialorder %v907, 8.507059e+37
    %v909 = vand.u32 %v897, 2147483648
    %v910 = vor.u32 1.1754944e-38, %v909
    %v911 = vsel %vm908, %v910, %v906
    %v912 = vmul.f32 1.0, %v911
    %v913 = vtanh.pop %v893
    %v914 = vmul.f32 %v912, %v866
    %916 = vrot.lane.b32.xlu0 %v913, 32
    %v917 = vpop.permute.xlu0 %916
    %v919 = vmul.f32 %v912, %v917
    %921 = vrot.lane.b32.xlu0 %v919, 32
    %v922 = vpop.permute.xlu0 %921
    %v924 = vadd.f32 %v914, %v922
    %v925 = vtanh.pop %v924
    %927 = vrot.lane.b32.xlu0 %v925, 32
    %v928 = vpop.permute.xlu0 %927
    %v930 = vmul.f32 %v912, %v928
    %v931 = vpack.c.bf16 %v930, %v930
    %933 = vrot.lane.b32.xlu0 %v931, 64
    %v934 = vpop.permute.xlu0 %933
    %v936 = vsel %vm70, %v934, 0
    %938 = vmatpush.bf16.msra.mxu0 0
    %939 = vmatpush.bf16.msra.mxu0 0
    %940 = vmatpush.bf16.msra.mxu0 0
    %941 = vmatpush.bf16.msra.mxu0 0
    %942 = vmatpush.bf16.msra.mxu0 0
    %943 = vmatpush.bf16.msra.mxu0 0
    %944 = vmatpush.bf16.msra.mxu0 %v585
    %945 = vmatpush.bf16.msra.mxu0 %v584
    %946 = vmatmul.bf16.gmra.mxu0 %v936
    %v947 = vpop.f32.mrf.mxu0
    %v948 = vadd.f32 0.0, %v947
    %v949 = vpop.f32.mrf.mxu0
    %950 = vdwg.mxu0
    %v951 = vadd.f32 %v641, %v948
    %v952 = vxor.u32 %v951, 2147483648
    %v953 = vmul.f32 %v952, 1.442695
    %v954 = vpow.pop %v953
    %v955 = vadd.f32 %v954, 1.0
    %v956 = vrcp.pop %v955
    %v957 = vmul.f32 %v955, %v956
    %v958 = vsub.f32 1.0, %v957
    %v959 = vmul.f32 %v956, %v958
    %v960 = vadd.f32 %v956, %v959
    %vm961 = vweird.f32 %v955
    %vm962 = vweird.f32 %v956
    %vm963 = vmor %vm961, %vm962
    %v964 = vsel %vm963, %v956, %v960
    %v965 = vand.u32 2147483647, %v955
    %vm966 = vcmp.eq.f32.partialorder %v965, 8.507059e+37
    %v967 = vand.u32 %v955, 2147483648
    %v968 = vor.u32 1.1754944e-38, %v967
    %v969 = vsel %vm966, %v968, %v964
    %v970 = vmul.f32 1.0, %v969
    %v971 = vtanh.pop %v951
    %v972 = vmul.f32 %v970, %v924
    %974 = vrot.lane.b32.xlu0 %v971, 32
    %v975 = vpop.permute.xlu0 %974
    %v977 = vmul.f32 %v970, %v975
    %979 = vrot.lane.b32.xlu0 %v977, 32
    %v980 = vpop.permute.xlu0 %979
    %v982 = vadd.f32 %v972, %v980
    %v983 = vtanh.pop %v982
    %985 = vrot.lane.b32.xlu0 %v983, 32
    %v986 = vpop.permute.xlu0 %985
    %v988 = vmul.f32 %v970, %v986
    %v989 = vpack.c.bf16 %v988, %v988
    %991 = vrot.lane.b32.xlu0 %v989, 64
    %v992 = vpop.permute.xlu0 %991
    %v994 = vsel %vm70, %v992, 0
    %996 = vmatpush.bf16.msra.mxu0 0
    %997 = vmatpush.bf16.msra.mxu0 0
    %998 = vmatpush.bf16.msra.mxu0 0
    %999 = vmatpush.bf16.msra.mxu0 0
    %1000 = vmatpush.bf16.msra.mxu0 0
    %1001 = vmatpush.bf16.msra.mxu0 0
    %1002 = vmatpush.bf16.msra.mxu0 %v585
    %1003 = vmatpush.bf16.msra.mxu0 %v584
    %1004 = vmatmul.bf16.gmra.mxu0 %v994
    %v1005 = vpop.f32.mrf.mxu0
    %v1006 = vadd.f32 0.0, %v1005
    %v1007 = vpop.f32.mrf.mxu0
    %1008 = vdwg.mxu0
    %v1009 = vadd.f32 %v644, %v1006
    %v1010 = vxor.u32 %v1009, 2147483648
    %v1011 = vmul.f32 %v1010, 1.442695
    %v1012 = vpow.pop %v1011
    %v1013 = vadd.f32 %v1012, 1.0
    %v1014 = vrcp.pop %v1013
    %v1015 = vmul.f32 %v1013, %v1014
    %v1016 = vsub.f32 1.0, %v1015
    %v1017 = vmul.f32 %v1014, %v1016
    %v1018 = vadd.f32 %v1014, %v1017
    %vm1019 = vweird.f32 %v1013
    %vm1020 = vweird.f32 %v1014
    %vm1021 = vmor %vm1019, %vm1020
    %v1022 = vsel %vm1021, %v1014, %v1018
    %v1023 = vand.u32 2147483647, %v1013
    %vm1024 = vcmp.eq.f32.partialorder %v1023, 8.507059e+37
    %v1025 = vand.u32 %v1013, 2147483648
    %v1026 = vor.u32 1.1754944e-38, %v1025
    %v1027 = vsel %vm1024, %v1026, %v1022
    %v1028 = vmul.f32 1.0, %v1027
    %v1029 = vtanh.pop %v1009
    %v1030 = vmul.f32 %v1028, %v982
    %1032 = vrot.lane.b32.xlu0 %v1029, 32
    %v1033 = vpop.permute.xlu0 %1032
    %v1035 = vmul.f32 %v1028, %v1033
    %1037 = vrot.lane.b32.xlu0 %v1035, 32
    %v1038 = vpop.permute.xlu0 %1037
    %v1040 = vadd.f32 %v1030, %v1038
    %v1041 = vtanh.pop %v1040
    %1043 = vrot.lane.b32.xlu0 %v1041, 32
    %v1044 = vpop.permute.xlu0 %1043
    %v1046 = vmul.f32 %v1028, %v1044
    %v1047 = vpack.c.bf16 %v1046, %v1046
    %1049 = vrot.lane.b32.xlu0 %v1047, 64
    %v1050 = vpop.permute.xlu0 %1049
    %v1052 = vsel %vm70, %v1050, 0
    %1054 = vmatpush.bf16.msra.mxu0 0
    %1055 = vmatpush.bf16.msra.mxu0 0
    %1056 = vmatpush.bf16.msra.mxu0 0
    %1057 = vmatpush.bf16.msra.mxu0 0
    %1058 = vmatpush.bf16.msra.mxu0 0
    %1059 = vmatpush.bf16.msra.mxu0 0
    %1060 = vmatpush.bf16.msra.mxu0 %v585
    %1061 = vmatpush.bf16.msra.mxu0 %v584
    %1062 = vmatmul.bf16.gmra.mxu0 %v1052
    %v1063 = vpop.f32.mrf.mxu0
    %v1064 = vadd.f32 0.0, %v1063
    %v1065 = vpop.f32.mrf.mxu0
    %1066 = vdwg.mxu0
    %v1067 = vadd.f32 %v646, %v1064
    %v1068 = vxor.u32 %v1067, 2147483648
    %v1069 = vmul.f32 %v1068, 1.442695
    %v1070 = vpow.pop %v1069
    %v1071 = vadd.f32 %v1070, 1.0
    %v1072 = vrcp.pop %v1071
    %v1073 = vmul.f32 %v1071, %v1072
    %v1074 = vsub.f32 1.0, %v1073
    %v1075 = vmul.f32 %v1072, %v1074
    %v1076 = vadd.f32 %v1072, %v1075
    %vm1077 = vweird.f32 %v1071
    %vm1078 = vweird.f32 %v1072
    %vm1079 = vmor %vm1077, %vm1078
    %v1080 = vsel %vm1079, %v1072, %v1076
    %v1081 = vand.u32 2147483647, %v1071
    %vm1082 = vcmp.eq.f32.partialorder %v1081, 8.507059e+37
    %v1083 = vand.u32 %v1071, 2147483648
    %v1084 = vor.u32 1.1754944e-38, %v1083
    %v1085 = vsel %vm1082, %v1084, %v1080
    %v1086 = vmul.f32 1.0, %v1085
    %v1087 = vtanh.pop %v1067
    %v1088 = vmul.f32 %v1086, %v1040
    %1090 = vrot.lane.b32.xlu0 %v1087, 32
    %v1091 = vpop.permute.xlu0 %1090
    %v1093 = vmul.f32 %v1086, %v1091
    %1095 = vrot.lane.b32.xlu0 %v1093, 32
    %v1096 = vpop.permute.xlu0 %1095
    %v1098 = vadd.f32 %v1088, %v1096
    %v1099 = vtanh.pop %v1098
    %1101 = vrot.lane.b32.xlu0 %v1099, 32
    %v1102 = vpop.permute.xlu0 %1101
    %v1104 = vmul.f32 %v1086, %v1102
    %v1105 = vld [vmem:[%s4] sm:$0x1]
    %v1107 = vperm.slane %v1105, 0
    %1108 = vrot.lane.b32.xlu0 %v1107, 64
    %v1109 = vpop.permute.xlu0 %1108
    %v1111 = vmul.f32 %v1104, %v1109
    %1113 = vrot.lane.b32.xlu0 %v1111, 64
    %v1114 = vpop.permute.xlu0 %1113
    %v1116 = vsel %vm70, %v1114, 0.0
    %1117 = vadd.xlane.f32.xlu0 %v1116
    %v1118 = vpop.xlane.xlu0 %1117
    %v1119 = vld [vmem:[#allocation2] sm:$0x1]
    %v1121 = vperm.slane %v1119, 0
    %v1123 = vadd.f32 %v1118, %v1121
    %v1124 = vxor.u32 %v1123, 2147483648
    %v1125 = vmul.f32 %v1124, 1.442695
    %v1126 = vpow.pop %v1125
    %v1127 = vadd.f32 %v1126, 1.0
    %v1128 = vrcp.pop %v1127
    %v1129 = vmul.f32 %v1127, %v1128
    %v1130 = vsub.f32 1.0, %v1129
    %v1131 = vmul.f32 %v1128, %v1130
    %v1132 = vadd.f32 %v1128, %v1131
    %vm1133 = vweird.f32 %v1127
    %vm1134 = vweird.f32 %v1128
    %vm1135 = vmor %vm1133, %vm1134
    %v1136 = vsel %vm1135, %v1128, %v1132
    %v1137 = vand.u32 2147483647, %v1127
    %vm1138 = vcmp.eq.f32.partialorder %v1137, 8.507059e+37
    %v1139 = vand.u32 %v1127, 2147483648
    %v1140 = vor.u32 1.1754944e-38, %v1139
    %v1141 = vsel %vm1138, %v1140, %v1136
    %v1142 = vmul.f32 1.0, %v1141
    %vm1143 = vcmask 7168
    %1144 = vst.msk [vmem:[%s6] sm:$0xff] %vm1143, %v1142
    // Predicated region
    $region30: #{ililstm_forward.1} parent=1 // pred_check
      _
    $region31: #{ililstm_forward.1} parent=1 // pred_check_branch
      %1146 = sbr.rel (0) target = $region33
    $region32: #{ililstm_forward.1} parent=1 // pred_region
      _
    $region33: #{ililstm_forward.1} parent=1 // pred_fallthru
      _
    // Predicated region
    $region34: #{ililstm_forward.1} parent=1 // pred_check
      _
    $region35: #{ililstm_forward.1} parent=1 // pred_check_branch
      %1148 = sbr.rel (0) target = $region37
    $region36: #{ililstm_forward.1} parent=1 // pred_region
      _
    $region37: #{ililstm_forward.1} parent=1 // pred_fallthru
      _
    %1149 = vsyncpa [#allocation4], 1

</llo_original>
